<compile_context>
chip_gen: v6e
topology: v6e:2x2x1
jax: 0.10.0
libtpu: 0.0.40
codegen_flags: <defaults>
</compile_context>

<pallas_src>
from functools import partial

import numpy as np
import jax
import jax.numpy as jnp
from jax import lax
from jax.experimental import pallas as pl
from jax.experimental.pallas import tpu as pltpu


def _pairwise_sum(vals):
    """Tree-sum a list of arrays (keeps the add dependency chain short)."""
    vals = list(vals)
    while len(vals) > 1:
        nxt = [vals[i] + vals[i + 1] for i in range(0, len(vals) - 1, 2)]
        if len(vals) % 2:
            nxt.append(vals[-1])
        vals = nxt
    return vals[0]


def _separable_filter_kernel(w_ref, x_ref, o_ref, h_ref):
    """Depthwise separable Gaussian filtering of all channels in one grid step.

    w_ref: (L_total*K,) flat per-channel 1-D Gaussian taps   (SMEM, scalars)
    x_ref: (Lb, Hp, Wp) zero-padded input channels           (VMEM)
    o_ref: (Lb, H, W)   output channels                      (VMEM)
    h_ref: (Hp, W)      horizontal-pass intermediate scratch (VMEM)
    """
    Lb, Hp, Wp = x_ref.shape
    H, W = o_ref.shape[1], o_ref.shape[2]
    K = Wp - W + 1                       # = 2*g_width + 1
    nacc = min(4, K)                     # parallel accumulators

    first_ch = pl.program_id(0) * Lb     # first global channel of this block

    for l in range(Lb):
        base = (first_ch + l) * K
        # Load the K scalar taps for this channel once from SMEM (scalar slots).
        taps = [w_ref[base + k] for k in range(K)]

        # --- horizontal pass (along W, lane axis): (Hp, Wp) -> (Hp, W) ------
        # Only K lane-shifted slices, each reused by the whole vertical pass.
        def htap(k):
            return x_ref[l, :, k:k + W] * taps[k]

        acc = [htap(k) for k in range(nacc)]
        for k in range(nacc, K):
            acc[k % nacc] = acc[k % nacc] + htap(k)
        h_ref[...] = _pairwise_sum(acc)

        # --- vertical pass (along H, sublane axis): (Hp, W) -> (H, W) -------
        def vtap(k):
            return h_ref[k:k + H, :] * taps[k]

        acc = [vtap(k) for k in range(nacc)]
        for k in range(nacc, K):
            acc[k % nacc] = acc[k % nacc] + vtap(k)
        o_ref[l, :, :] = _pairwise_sum(acc)


def build_gaussian_filter_2d(stat_mat: np.ndarray, g_width: int) -> np.ndarray:
    """Replicates HeatmapFilter.__init__ filter construction (gaussian mode).

    Returns (L, K, K) float32 with K = 2*g_width + 1 (used by the reference).
    """
    x = np.arange(2 * g_width + 1) - g_width
    y = x[:, np.newaxis]
    sig = (stat_mat[:, 0, 0] * 2).reshape((1, 1, -1))
    filt = np.exp(-(x ** 2 + y ** 2).reshape((2 * g_width + 1, 2 * g_width + 1, 1))
                  / (2 * sig ** 2))
    filt = filt[np.newaxis].transpose((3, 0, 1, 2))[:, 0, :, :]
    return filt.astype(np.float32)


def build_gaussian_filter_1d(stat_mat: np.ndarray, g_width: int) -> np.ndarray:
    """Separable 1-D factors g_l[k] = exp(-(k-g)^2 / (2*sigma_l^2)), (L, K).

    Outer product g_l[ky]*g_l[kx] reproduces build_gaussian_filter_2d exactly
    (no normalization anywhere, matching the PyTorch module).
    """
    x = (np.arange(2 * g_width + 1) - g_width).astype(np.float64)
    sig = (stat_mat[:, 0, 0].astype(np.float64) * 2).reshape(-1, 1)   # (L, 1)
    return np.exp(-(x[np.newaxis, :] ** 2) / (2 * sig ** 2)).astype(np.float32)


@partial(jax.jit, static_argnames=("g_width", "l_blocks"))
def heatmap_filter_gaussian(hm: jnp.ndarray, filt1d: jnp.ndarray,
                            g_width: int, l_blocks: int = 1) -> jnp.ndarray:
    """Depthwise "same" Gaussian filtering of hm (L, H, W).

    filt1d: (L, K) separable per-channel 1-D Gaussian taps.
    l_blocks: grid size over landmark chunks (1 for v5e/v6e; 2 shards the
              landmark axis across v7x's two TensorCores).
    """
    L, H, W = hm.shape
    K = 2 * g_width + 1
    assert filt1d.shape == (L, K)
    assert L % l_blocks == 0
    Lb = L // l_blocks
    g = g_width
    Hp, Wp = H + 2 * g, W + 2 * g

    # Tiny zero-pad; jit keeps it in the same XLA program as the kernel.
    hm_pad = jnp.pad(hm.astype(jnp.float32), ((0, 0), (g, g), (g, g)))
    # Flat 1-D tap table -> SMEM (1-D avoids the 2-D SMEM padding blow-up).
    w_flat = filt1d.astype(jnp.float32).reshape(L * K)

    return pl.pallas_call(
        _separable_filter_kernel,
        out_shape=jax.ShapeDtypeStruct((L, H, W), jnp.float32),
        grid=(l_blocks,),
        in_specs=[
            pl.BlockSpec(memory_space=pltpu.MemorySpace.SMEM),   # taps (scalars)
            pl.BlockSpec((Lb, Hp, Wp), lambda i: (i, 0, 0)),     # padded input
        ],
        out_specs=pl.BlockSpec((Lb, H, W), lambda i: (i, 0, 0)),
        scratch_shapes=[pltpu.VMEM((Hp, W), jnp.float32)],
        compiler_params=pltpu.CompilerParams(
            dimension_semantics=("parallel",)),
    )(w_flat, hm_pad)


def reference_depthwise_conv(hm: jnp.ndarray, filt2d: jnp.ndarray,
                             g_width: int) -> jnp.ndarray:
    """Pure-JAX reference (matches torch depthwise Conv2d, padding=g_width)."""
    L = hm.shape[0]
    lhs = hm[None].astype(jnp.float32)                 # (1, L, H, W)
    rhs = filt2d[:, None, :, :].astype(jnp.float32)    # (L, 1, K, K)  OIHW
    out = lax.conv_general_dilated(
        lhs, rhs,
        window_strides=(1, 1),
        padding=[(g_width, g_width), (g_width, g_width)],
        dimension_numbers=("NCHW", "OIHW", "NCHW"),
        feature_group_count=L,
    )
    return out[0]


if __name__ == "__main__":
    g_width = 6                      # module default -> 13x13 kernel
    num_landmarks = 4                # "channels"
    H = W = 16                       # small spatial size

    # Deterministic synthetic parameters (stand-in for stat_mat) and input.
    key = jax.random.PRNGKey(0)
    k_stat, k_hm = jax.random.split(key)
    stat_vals = 1.0 + jax.random.uniform(k_stat, (num_landmarks,)) * 2.0
    stat_mat = np.asarray(stat_vals, dtype=np.float32).reshape(num_landmarks, 1, 1)
    heatmap_scale = 1.0              # unused in gaussian forward (kept for fidelity)

    filt2d = build_gaussian_filter_2d(stat_mat, g_width)     # (L, K, K) reference
    filt1d = build_gaussian_filter_1d(stat_mat, g_width)     # (L, K) separable

    # Sanity: the separable factors reproduce the module's 2-D filter exactly.
    np.testing.assert_allclose(filt1d[:, :, None] * filt1d[:, None, :],
                               filt2d, rtol=1e-5, atol=1e-7)

    hm = jax.random.normal(k_hm, (num_landmarks, H, W), dtype=jnp.float32)

    out = heatmap_filter_gaussian(hm, jnp.asarray(filt1d), g_width)
    out = jax.block_until_ready(out)

    ref = jax.block_until_ready(
        reference_depthwise_conv(hm, jnp.asarray(filt2d), g_width))
    np.testing.assert_allclose(np.asarray(out), np.asarray(ref),
                               rtol=1e-5, atol=1e-4)

    # TODO(synk): 'uniform' mode (argmax-based stamp placement) is a
    # data-dependent scatter on tiny tensors; not implemented as a Pallas kernel.
    print("KERNEL_OK")
</pallas_src>

<mosaic_0001>
module attributes {stable_mosaic.version = 11 : i64} {
  func.func @_separable_filter_kernel(%arg0: i32, %arg1: memref<52xf32, #tpu.memory_space<smem>>, %arg2: memref<4x28x28xf32, #tpu.memory_space<vmem>>, %arg3: memref<4x16x16xf32, #tpu.memory_space<vmem>>, %arg4: memref<28x16xf32, #tpu.memory_space<vmem>>) attributes {dimension_semantics = [#tpu.dimension_semantics<parallel>], iteration_bounds = array<i64: 1>, scalar_prefetch = 0 : i64, scratch_operands = 1 : i64, tpu.core_type = #tpu.core_type<tc>, window_params = [{transform_indices = @transform_0, window_bounds = array<i64: 52>}, {transform_indices = @transform_1, window_bounds = array<i64: 4, 28, 28>}, {transform_indices = @transform_2, window_bounds = array<i64: 4, 16, 16>}]} {
    %c4_i32 = arith.constant 4 : i32
    %0 = arith.muli %arg0, %c4_i32 : i32
    %c0_i32 = arith.constant 0 : i32
    %1 = arith.addi %0, %c0_i32 : i32
    %c13_i32 = arith.constant 13 : i32
    %2 = arith.muli %1, %c13_i32 : i32
    %c0_i32_0 = arith.constant 0 : i32
    %3 = arith.addi %2, %c0_i32_0 : i32
    %4 = arith.index_cast %3 : i32 to index
    %5 = memref.load %arg1[%4] : memref<52xf32, #tpu.memory_space<smem>>
    %c1_i32 = arith.constant 1 : i32
    %6 = arith.addi %2, %c1_i32 : i32
    %7 = arith.index_cast %6 : i32 to index
    %8 = memref.load %arg1[%7] : memref<52xf32, #tpu.memory_space<smem>>
    %c2_i32 = arith.constant 2 : i32
    %9 = arith.addi %2, %c2_i32 : i32
    %10 = arith.index_cast %9 : i32 to index
    %11 = memref.load %arg1[%10] : memref<52xf32, #tpu.memory_space<smem>>
    %c3_i32 = arith.constant 3 : i32
    %12 = arith.addi %2, %c3_i32 : i32
    %13 = arith.index_cast %12 : i32 to index
    %14 = memref.load %arg1[%13] : memref<52xf32, #tpu.memory_space<smem>>
    %c4_i32_1 = arith.constant 4 : i32
    %15 = arith.addi %2, %c4_i32_1 : i32
    %16 = arith.index_cast %15 : i32 to index
    %17 = memref.load %arg1[%16] : memref<52xf32, #tpu.memory_space<smem>>
    %c5_i32 = arith.constant 5 : i32
    %18 = arith.addi %2, %c5_i32 : i32
    %19 = arith.index_cast %18 : i32 to index
    %20 = memref.load %arg1[%19] : memref<52xf32, #tpu.memory_space<smem>>
    %c6_i32 = arith.constant 6 : i32
    %21 = arith.addi %2, %c6_i32 : i32
    %22 = arith.index_cast %21 : i32 to index
    %23 = memref.load %arg1[%22] : memref<52xf32, #tpu.memory_space<smem>>
    %c7_i32 = arith.constant 7 : i32
    %24 = arith.addi %2, %c7_i32 : i32
    %25 = arith.index_cast %24 : i32 to index
    %26 = memref.load %arg1[%25] : memref<52xf32, #tpu.memory_space<smem>>
    %c8_i32 = arith.constant 8 : i32
    %27 = arith.addi %2, %c8_i32 : i32
    %28 = arith.index_cast %27 : i32 to index
    %29 = memref.load %arg1[%28] : memref<52xf32, #tpu.memory_space<smem>>
    %c9_i32 = arith.constant 9 : i32
    %30 = arith.addi %2, %c9_i32 : i32
    %31 = arith.index_cast %30 : i32 to index
    %32 = memref.load %arg1[%31] : memref<52xf32, #tpu.memory_space<smem>>
    %c10_i32 = arith.constant 10 : i32
    %33 = arith.addi %2, %c10_i32 : i32
    %34 = arith.index_cast %33 : i32 to index
    %35 = memref.load %arg1[%34] : memref<52xf32, #tpu.memory_space<smem>>
    %c11_i32 = arith.constant 11 : i32
    %36 = arith.addi %2, %c11_i32 : i32
    %37 = arith.index_cast %36 : i32 to index
    %38 = memref.load %arg1[%37] : memref<52xf32, #tpu.memory_space<smem>>
    %c12_i32 = arith.constant 12 : i32
    %39 = arith.addi %2, %c12_i32 : i32
    %40 = arith.index_cast %39 : i32 to index
    %41 = memref.load %arg1[%40] : memref<52xf32, #tpu.memory_space<smem>>
    %c0 = arith.constant 0 : index
    %c0_2 = arith.constant 0 : index
    %c0_3 = arith.constant 0 : index
    %42 = vector.load %arg2[%c0, %c0_2, %c0_3] : memref<4x28x28xf32, #tpu.memory_space<vmem>>, vector<1x28x16xf32>
    %43 = vector.shape_cast %42 : vector<1x28x16xf32> to vector<28x16xf32>
    %44 = vector.broadcast %5 : f32 to vector<28x16xf32>
    %45 = arith.mulf %43, %44 : vector<28x16xf32>
    %c0_4 = arith.constant 0 : index
    %c0_5 = arith.constant 0 : index
    %c1 = arith.constant 1 : index
    %46 = vector.load %arg2[%c0_4, %c0_5, %c1] : memref<4x28x28xf32, #tpu.memory_space<vmem>>, vector<1x28x16xf32>
    %47 = vector.shape_cast %46 : vector<1x28x16xf32> to vector<28x16xf32>
    %48 = vector.broadcast %8 : f32 to vector<28x16xf32>
    %49 = arith.mulf %47, %48 : vector<28x16xf32>
    %c0_6 = arith.constant 0 : index
    %c0_7 = arith.constant 0 : index
    %c2 = arith.constant 2 : index
    %50 = vector.load %arg2[%c0_6, %c0_7, %c2] : memref<4x28x28xf32, #tpu.memory_space<vmem>>, vector<1x28x16xf32>
    %51 = vector.shape_cast %50 : vector<1x28x16xf32> to vector<28x16xf32>
    %52 = vector.broadcast %11 : f32 to vector<28x16xf32>
    %53 = arith.mulf %51, %52 : vector<28x16xf32>
    %c0_8 = arith.constant 0 : index
    %c0_9 = arith.constant 0 : index
    %c3 = arith.constant 3 : index
    %54 = vector.load %arg2[%c0_8, %c0_9, %c3] : memref<4x28x28xf32, #tpu.memory_space<vmem>>, vector<1x28x16xf32>
    %55 = vector.shape_cast %54 : vector<1x28x16xf32> to vector<28x16xf32>
    %56 = vector.broadcast %14 : f32 to vector<28x16xf32>
    %57 = arith.mulf %55, %56 : vector<28x16xf32>
    %c0_10 = arith.constant 0 : index
    %c0_11 = arith.constant 0 : index
    %c4 = arith.constant 4 : index
    %58 = vector.load %arg2[%c0_10, %c0_11, %c4] : memref<4x28x28xf32, #tpu.memory_space<vmem>>, vector<1x28x16xf32>
    %59 = vector.shape_cast %58 : vector<1x28x16xf32> to vector<28x16xf32>
    %60 = vector.broadcast %17 : f32 to vector<28x16xf32>
    %61 = arith.mulf %59, %60 : vector<28x16xf32>
    %62 = arith.addf %45, %61 : vector<28x16xf32>
    %c0_12 = arith.constant 0 : index
    %c0_13 = arith.constant 0 : index
    %c5 = arith.constant 5 : index
    %63 = vector.load %arg2[%c0_12, %c0_13, %c5] : memref<4x28x28xf32, #tpu.memory_space<vmem>>, vector<1x28x16xf32>
    %64 = vector.shape_cast %63 : vector<1x28x16xf32> to vector<28x16xf32>
    %65 = vector.broadcast %20 : f32 to vector<28x16xf32>
    %66 = arith.mulf %64, %65 : vector<28x16xf32>
    %67 = arith.addf %49, %66 : vector<28x16xf32>
    %c0_14 = arith.constant 0 : index
    %c0_15 = arith.constant 0 : index
    %c6 = arith.constant 6 : index
    %68 = vector.load %arg2[%c0_14, %c0_15, %c6] : memref<4x28x28xf32, #tpu.memory_space<vmem>>, vector<1x28x16xf32>
    %69 = vector.shape_cast %68 : vector<1x28x16xf32> to vector<28x16xf32>
    %70 = vector.broadcast %23 : f32 to vector<28x16xf32>
    %71 = arith.mulf %69, %70 : vector<28x16xf32>
    %72 = arith.addf %53, %71 : vector<28x16xf32>
    %c0_16 = arith.constant 0 : index
    %c0_17 = arith.constant 0 : index
    %c7 = arith.constant 7 : index
    %73 = vector.load %arg2[%c0_16, %c0_17, %c7] : memref<4x28x28xf32, #tpu.memory_space<vmem>>, vector<1x28x16xf32>
    %74 = vector.shape_cast %73 : vector<1x28x16xf32> to vector<28x16xf32>
    %75 = vector.broadcast %26 : f32 to vector<28x16xf32>
    %76 = arith.mulf %74, %75 : vector<28x16xf32>
    %77 = arith.addf %57, %76 : vector<28x16xf32>
    %c0_18 = arith.constant 0 : index
    %c0_19 = arith.constant 0 : index
    %c8 = arith.constant 8 : index
    %78 = vector.load %arg2[%c0_18, %c0_19, %c8] : memref<4x28x28xf32, #tpu.memory_space<vmem>>, vector<1x28x16xf32>
    %79 = vector.shape_cast %78 : vector<1x28x16xf32> to vector<28x16xf32>
    %80 = vector.broadcast %29 : f32 to vector<28x16xf32>
    %81 = arith.mulf %79, %80 : vector<28x16xf32>
    %82 = arith.addf %62, %81 : vector<28x16xf32>
    %c0_20 = arith.constant 0 : index
    %c0_21 = arith.constant 0 : index
    %c9 = arith.constant 9 : index
    %83 = vector.load %arg2[%c0_20, %c0_21, %c9] : memref<4x28x28xf32, #tpu.memory_space<vmem>>, vector<1x28x16xf32>
    %84 = vector.shape_cast %83 : vector<1x28x16xf32> to vector<28x16xf32>
    %85 = vector.broadcast %32 : f32 to vector<28x16xf32>
    %86 = arith.mulf %84, %85 : vector<28x16xf32>
    %87 = arith.addf %67, %86 : vector<28x16xf32>
    %c0_22 = arith.constant 0 : index
    %c0_23 = arith.constant 0 : index
    %c10 = arith.constant 10 : index
    %88 = vector.load %arg2[%c0_22, %c0_23, %c10] : memref<4x28x28xf32, #tpu.memory_space<vmem>>, vector<1x28x16xf32>
    %89 = vector.shape_cast %88 : vector<1x28x16xf32> to vector<28x16xf32>
    %90 = vector.broadcast %35 : f32 to vector<28x16xf32>
    %91 = arith.mulf %89, %90 : vector<28x16xf32>
    %92 = arith.addf %72, %91 : vector<28x16xf32>
    %c0_24 = arith.constant 0 : index
    %c0_25 = arith.constant 0 : index
    %c11 = arith.constant 11 : index
    %93 = vector.load %arg2[%c0_24, %c0_25, %c11] : memref<4x28x28xf32, #tpu.memory_space<vmem>>, vector<1x28x16xf32>
    %94 = vector.shape_cast %93 : vector<1x28x16xf32> to vector<28x16xf32>
    %95 = vector.broadcast %38 : f32 to vector<28x16xf32>
    %96 = arith.mulf %94, %95 : vector<28x16xf32>
    %97 = arith.addf %77, %96 : vector<28x16xf32>
    %c0_26 = arith.constant 0 : index
    %c0_27 = arith.constant 0 : index
    %c12 = arith.constant 12 : index
    %98 = vector.load %arg2[%c0_26, %c0_27, %c12] : memref<4x28x28xf32, #tpu.memory_space<vmem>>, vector<1x28x16xf32>
    %99 = vector.shape_cast %98 : vector<1x28x16xf32> to vector<28x16xf32>
    %100 = vector.broadcast %41 : f32 to vector<28x16xf32>
    %101 = arith.mulf %99, %100 : vector<28x16xf32>
    %102 = arith.addf %82, %101 : vector<28x16xf32>
    %103 = arith.addf %102, %87 : vector<28x16xf32>
    %104 = arith.addf %92, %97 : vector<28x16xf32>
    %105 = arith.addf %103, %104 : vector<28x16xf32>
    %c0_28 = arith.constant 0 : index
    %c0_29 = arith.constant 0 : index
    %106 = vector.load %arg4[%c0_28, %c0_29] : memref<28x16xf32, #tpu.memory_space<vmem>>, vector<28x16xf32>
    tpu.vector_store %arg4[%c0_28, %c0_29], %105 {strides = array<i32>} : memref<28x16xf32, #tpu.memory_space<vmem>>, vector<28x16xf32>,
    %c0_30 = arith.constant 0 : index
    %c0_31 = arith.constant 0 : index
    %107 = vector.load %arg4[%c0_30, %c0_31] : memref<28x16xf32, #tpu.memory_space<vmem>>, vector<16x16xf32>
    %108 = vector.broadcast %5 : f32 to vector<16x16xf32>
    %109 = arith.mulf %107, %108 : vector<16x16xf32>
    %c1_32 = arith.constant 1 : index
    %c0_33 = arith.constant 0 : index
    %110 = vector.load %arg4[%c1_32, %c0_33] : memref<28x16xf32, #tpu.memory_space<vmem>>, vector<16x16xf32>
    %111 = vector.broadcast %8 : f32 to vector<16x16xf32>
    %112 = arith.mulf %110, %111 : vector<16x16xf32>
    %c2_34 = arith.constant 2 : index
    %c0_35 = arith.constant 0 : index
    %113 = vector.load %arg4[%c2_34, %c0_35] : memref<28x16xf32, #tpu.memory_space<vmem>>, vector<16x16xf32>
    %114 = vector.broadcast %11 : f32 to vector<16x16xf32>
    %115 = arith.mulf %113, %114 : vector<16x16xf32>
    %c3_36 = arith.constant 3 : index
    %c0_37 = arith.constant 0 : index
    %116 = vector.load %arg4[%c3_36, %c0_37] : memref<28x16xf32, #tpu.memory_space<vmem>>, vector<16x16xf32>
    %117 = vector.broadcast %14 : f32 to vector<16x16xf32>
    %118 = arith.mulf %116, %117 : vector<16x16xf32>
    %c4_38 = arith.constant 4 : index
    %c0_39 = arith.constant 0 : index
    %119 = vector.load %arg4[%c4_38, %c0_39] : memref<28x16xf32, #tpu.memory_space<vmem>>, vector<16x16xf32>
    %120 = vector.broadcast %17 : f32 to vector<16x16xf32>
    %121 = arith.mulf %119, %120 : vector<16x16xf32>
    %122 = arith.addf %109, %121 : vector<16x16xf32>
    %c5_40 = arith.constant 5 : index
    %c0_41 = arith.constant 0 : index
    %123 = vector.load %arg4[%c5_40, %c0_41] : memref<28x16xf32, #tpu.memory_space<vmem>>, vector<16x16xf32>
    %124 = vector.broadcast %20 : f32 to vector<16x16xf32>
    %125 = arith.mulf %123, %124 : vector<16x16xf32>
    %126 = arith.addf %112, %125 : vector<16x16xf32>
    %c6_42 = arith.constant 6 : index
    %c0_43 = arith.constant 0 : index
    %127 = vector.load %arg4[%c6_42, %c0_43] : memref<28x16xf32, #tpu.memory_space<vmem>>, vector<16x16xf32>
    %128 = vector.broadcast %23 : f32 to vector<16x16xf32>
    %129 = arith.mulf %127, %128 : vector<16x16xf32>
    %130 = arith.addf %115, %129 : vector<16x16xf32>
    %c7_44 = arith.constant 7 : index
    %c0_45 = arith.constant 0 : index
    %131 = vector.load %arg4[%c7_44, %c0_45] : memref<28x16xf32, #tpu.memory_space<vmem>>, vector<16x16xf32>
    %132 = vector.broadcast %26 : f32 to vector<16x16xf32>
    %133 = arith.mulf %131, %132 : vector<16x16xf32>
    %134 = arith.addf %118, %133 : vector<16x16xf32>
    %c8_46 = arith.constant 8 : index
    %c0_47 = arith.constant 0 : index
    %135 = vector.load %arg4[%c8_46, %c0_47] : memref<28x16xf32, #tpu.memory_space<vmem>>, vector<16x16xf32>
    %136 = vector.broadcast %29 : f32 to vector<16x16xf32>
    %137 = arith.mulf %135, %136 : vector<16x16xf32>
    %138 = arith.addf %122, %137 : vector<16x16xf32>
    %c9_48 = arith.constant 9 : index
    %c0_49 = arith.constant 0 : index
    %139 = vector.load %arg4[%c9_48, %c0_49] : memref<28x16xf32, #tpu.memory_space<vmem>>, vector<16x16xf32>
    %140 = vector.broadcast %32 : f32 to vector<16x16xf32>
    %141 = arith.mulf %139, %140 : vector<16x16xf32>
    %142 = arith.addf %126, %141 : vector<16x16xf32>
    %c10_50 = arith.constant 10 : index
    %c0_51 = arith.constant 0 : index
    %143 = vector.load %arg4[%c10_50, %c0_51] : memref<28x16xf32, #tpu.memory_space<vmem>>, vector<16x16xf32>
    %144 = vector.broadcast %35 : f32 to vector<16x16xf32>
    %145 = arith.mulf %143, %144 : vector<16x16xf32>
    %146 = arith.addf %130, %145 : vector<16x16xf32>
    %c11_52 = arith.constant 11 : index
    %c0_53 = arith.constant 0 : index
    %147 = vector.load %arg4[%c11_52, %c0_53] : memref<28x16xf32, #tpu.memory_space<vmem>>, vector<16x16xf32>
    %148 = vector.broadcast %38 : f32 to vector<16x16xf32>
    %149 = arith.mulf %147, %148 : vector<16x16xf32>
    %150 = arith.addf %134, %149 : vector<16x16xf32>
    %c12_54 = arith.constant 12 : index
    %c0_55 = arith.constant 0 : index
    %151 = vector.load %arg4[%c12_54, %c0_55] : memref<28x16xf32, #tpu.memory_space<vmem>>, vector<16x16xf32>
    %152 = vector.broadcast %41 : f32 to vector<16x16xf32>
    %153 = arith.mulf %151, %152 : vector<16x16xf32>
    %154 = arith.addf %138, %153 : vector<16x16xf32>
    %155 = arith.addf %154, %142 : vector<16x16xf32>
    %156 = arith.addf %146, %150 : vector<16x16xf32>
    %157 = arith.addf %155, %156 : vector<16x16xf32>
    %c0_56 = arith.constant 0 : index
    %c0_57 = arith.constant 0 : index
    %c0_58 = arith.constant 0 : index
    %158 = vector.load %arg3[%c0_56, %c0_57, %c0_58] : memref<4x16x16xf32, #tpu.memory_space<vmem>>, vector<1x16x16xf32>
    %159 = vector.shape_cast %158 : vector<1x16x16xf32> to vector<16x16xf32>
    %160 = vector.shape_cast %157 : vector<16x16xf32> to vector<1x16x16xf32>
    tpu.vector_store %arg3[%c0_56, %c0_57, %c0_58], %160 {strides = array<i32>} : memref<4x16x16xf32, #tpu.memory_space<vmem>>, vector<1x16x16xf32>,
    %c1_i32_59 = arith.constant 1 : i32
    %161 = arith.addi %0, %c1_i32_59 : i32
    %c13_i32_60 = arith.constant 13 : i32
    %162 = arith.muli %161, %c13_i32_60 : i32
    %c0_i32_61 = arith.constant 0 : i32
    %163 = arith.addi %162, %c0_i32_61 : i32
    %164 = arith.index_cast %163 : i32 to index
    %165 = memref.load %arg1[%164] : memref<52xf32, #tpu.memory_space<smem>>
    %c1_i32_62 = arith.constant 1 : i32
    %166 = arith.addi %162, %c1_i32_62 : i32
    %167 = arith.index_cast %166 : i32 to index
    %168 = memref.load %arg1[%167] : memref<52xf32, #tpu.memory_space<smem>>
    %c2_i32_63 = arith.constant 2 : i32
    %169 = arith.addi %162, %c2_i32_63 : i32
    %170 = arith.index_cast %169 : i32 to index
    %171 = memref.load %arg1[%170] : memref<52xf32, #tpu.memory_space<smem>>
    %c3_i32_64 = arith.constant 3 : i32
    %172 = arith.addi %162, %c3_i32_64 : i32
    %173 = arith.index_cast %172 : i32 to index
    %174 = memref.load %arg1[%173] : memref<52xf32, #tpu.memory_space<smem>>
    %c4_i32_65 = arith.constant 4 : i32
    %175 = arith.addi %162, %c4_i32_65 : i32
    %176 = arith.index_cast %175 : i32 to index
    %177 = memref.load %arg1[%176] : memref<52xf32, #tpu.memory_space<smem>>
    %c5_i32_66 = arith.constant 5 : i32
    %178 = arith.addi %162, %c5_i32_66 : i32
    %179 = arith.index_cast %178 : i32 to index
    %180 = memref.load %arg1[%179] : memref<52xf32, #tpu.memory_space<smem>>
    %c6_i32_67 = arith.constant 6 : i32
    %181 = arith.addi %162, %c6_i32_67 : i32
    %182 = arith.index_cast %181 : i32 to index
    %183 = memref.load %arg1[%182] : memref<52xf32, #tpu.memory_space<smem>>
    %c7_i32_68 = arith.constant 7 : i32
    %184 = arith.addi %162, %c7_i32_68 : i32
    %185 = arith.index_cast %184 : i32 to index
    %186 = memref.load %arg1[%185] : memref<52xf32, #tpu.memory_space<smem>>
    %c8_i32_69 = arith.constant 8 : i32
    %187 = arith.addi %162, %c8_i32_69 : i32
    %188 = arith.index_cast %187 : i32 to index
    %189 = memref.load %arg1[%188] : memref<52xf32, #tpu.memory_space<smem>>
    %c9_i32_70 = arith.constant 9 : i32
    %190 = arith.addi %162, %c9_i32_70 : i32
    %191 = arith.index_cast %190 : i32 to index
    %192 = memref.load %arg1[%191] : memref<52xf32, #tpu.memory_space<smem>>
    %c10_i32_71 = arith.constant 10 : i32
    %193 = arith.addi %162, %c10_i32_71 : i32
    %194 = arith.index_cast %193 : i32 to index
    %195 = memref.load %arg1[%194] : memref<52xf32, #tpu.memory_space<smem>>
    %c11_i32_72 = arith.constant 11 : i32
    %196 = arith.addi %162, %c11_i32_72 : i32
    %197 = arith.index_cast %196 : i32 to index
    %198 = memref.load %arg1[%197] : memref<52xf32, #tpu.memory_space<smem>>
    %c12_i32_73 = arith.constant 12 : i32
    %199 = arith.addi %162, %c12_i32_73 : i32
    %200 = arith.index_cast %199 : i32 to index
    %201 = memref.load %arg1[%200] : memref<52xf32, #tpu.memory_space<smem>>
    %c1_74 = arith.constant 1 : index
    %c0_75 = arith.constant 0 : index
    %c0_76 = arith.constant 0 : index
    %202 = vector.load %arg2[%c1_74, %c0_75, %c0_76] : memref<4x28x28xf32, #tpu.memory_space<vmem>>, vector<1x28x16xf32>
    %203 = vector.shape_cast %202 : vector<1x28x16xf32> to vector<28x16xf32>
    %204 = vector.broadcast %165 : f32 to vector<28x16xf32>
    %205 = arith.mulf %203, %204 : vector<28x16xf32>
    %c1_77 = arith.constant 1 : index
    %c0_78 = arith.constant 0 : index
    %c1_79 = arith.constant 1 : index
    %206 = vector.load %arg2[%c1_77, %c0_78, %c1_79] : memref<4x28x28xf32, #tpu.memory_space<vmem>>, vector<1x28x16xf32>
    %207 = vector.shape_cast %206 : vector<1x28x16xf32> to vector<28x16xf32>
    %208 = vector.broadcast %168 : f32 to vector<28x16xf32>
    %209 = arith.mulf %207, %208 : vector<28x16xf32>
    %c1_80 = arith.constant 1 : index
    %c0_81 = arith.constant 0 : index
    %c2_82 = arith.constant 2 : index
    %210 = vector.load %arg2[%c1_80, %c0_81, %c2_82] : memref<4x28x28xf32, #tpu.memory_space<vmem>>, vector<1x28x16xf32>
    %211 = vector.shape_cast %210 : vector<1x28x16xf32> to vector<28x16xf32>
    %212 = vector.broadcast %171 : f32 to vector<28x16xf32>
    %213 = arith.mulf %211, %212 : vector<28x16xf32>
    %c1_83 = arith.constant 1 : index
    %c0_84 = arith.constant 0 : index
    %c3_85 = arith.constant 3 : index
    %214 = vector.load %arg2[%c1_83, %c0_84, %c3_85] : memref<4x28x28xf32, #tpu.memory_space<vmem>>, vector<1x28x16xf32>
    %215 = vector.shape_cast %214 : vector<1x28x16xf32> to vector<28x16xf32>
    %216 = vector.broadcast %174 : f32 to vector<28x16xf32>
    %217 = arith.mulf %215, %216 : vector<28x16xf32>
    %c1_86 = arith.constant 1 : index
    %c0_87 = arith.constant 0 : index
    %c4_88 = arith.constant 4 : index
    %218 = vector.load %arg2[%c1_86, %c0_87, %c4_88] : memref<4x28x28xf32, #tpu.memory_space<vmem>>, vector<1x28x16xf32>
    %219 = vector.shape_cast %218 : vector<1x28x16xf32> to vector<28x16xf32>
    %220 = vector.broadcast %177 : f32 to vector<28x16xf32>
    %221 = arith.mulf %219, %220 : vector<28x16xf32>
    %222 = arith.addf %205, %221 : vector<28x16xf32>
    %c1_89 = arith.constant 1 : index
    %c0_90 = arith.constant 0 : index
    %c5_91 = arith.constant 5 : index
    %223 = vector.load %arg2[%c1_89, %c0_90, %c5_91] : memref<4x28x28xf32, #tpu.memory_space<vmem>>, vector<1x28x16xf32>
    %224 = vector.shape_cast %223 : vector<1x28x16xf32> to vector<28x16xf32>
    %225 = vector.broadcast %180 : f32 to vector<28x16xf32>
    %226 = arith.mulf %224, %225 : vector<28x16xf32>
    %227 = arith.addf %209, %226 : vector<28x16xf32>
    %c1_92 = arith.constant 1 : index
    %c0_93 = arith.constant 0 : index
    %c6_94 = arith.constant 6 : index
    %228 = vector.load %arg2[%c1_92, %c0_93, %c6_94] : memref<4x28x28xf32, #tpu.memory_space<vmem>>, vector<1x28x16xf32>
    %229 = vector.shape_cast %228 : vector<1x28x16xf32> to vector<28x16xf32>
    %230 = vector.broadcast %183 : f32 to vector<28x16xf32>
    %231 = arith.mulf %229, %230 : vector<28x16xf32>
    %232 = arith.addf %213, %231 : vector<28x16xf32>
    %c1_95 = arith.constant 1 : index
    %c0_96 = arith.constant 0 : index
    %c7_97 = arith.constant 7 : index
    %233 = vector.load %arg2[%c1_95, %c0_96, %c7_97] : memref<4x28x28xf32, #tpu.memory_space<vmem>>, vector<1x28x16xf32>
    %234 = vector.shape_cast %233 : vector<1x28x16xf32> to vector<28x16xf32>
    %235 = vector.broadcast %186 : f32 to vector<28x16xf32>
    %236 = arith.mulf %234, %235 : vector<28x16xf32>
    %237 = arith.addf %217, %236 : vector<28x16xf32>
    %c1_98 = arith.constant 1 : index
    %c0_99 = arith.constant 0 : index
    %c8_100 = arith.constant 8 : index
    %238 = vector.load %arg2[%c1_98, %c0_99, %c8_100] : memref<4x28x28xf32, #tpu.memory_space<vmem>>, vector<1x28x16xf32>
    %239 = vector.shape_cast %238 : vector<1x28x16xf32> to vector<28x16xf32>
    %240 = vector.broadcast %189 : f32 to vector<28x16xf32>
    %241 = arith.mulf %239, %240 : vector<28x16xf32>
    %242 = arith.addf %222, %241 : vector<28x16xf32>
    %c1_101 = arith.constant 1 : index
    %c0_102 = arith.constant 0 : index
    %c9_103 = arith.constant 9 : index
    %243 = vector.load %arg2[%c1_101, %c0_102, %c9_103] : memref<4x28x28xf32, #tpu.memory_space<vmem>>, vector<1x28x16xf32>
    %244 = vector.shape_cast %243 : vector<1x28x16xf32> to vector<28x16xf32>
    %245 = vector.broadcast %192 : f32 to vector<28x16xf32>
    %246 = arith.mulf %244, %245 : vector<28x16xf32>
    %247 = arith.addf %227, %246 : vector<28x16xf32>
    %c1_104 = arith.constant 1 : index
    %c0_105 = arith.constant 0 : index
    %c10_106 = arith.constant 10 : index
    %248 = vector.load %arg2[%c1_104, %c0_105, %c10_106] : memref<4x28x28xf32, #tpu.memory_space<vmem>>, vector<1x28x16xf32>
    %249 = vector.shape_cast %248 : vector<1x28x16xf32> to vector<28x16xf32>
    %250 = vector.broadcast %195 : f32 to vector<28x16xf32>
    %251 = arith.mulf %249, %250 : vector<28x16xf32>
    %252 = arith.addf %232, %251 : vector<28x16xf32>
    %c1_107 = arith.constant 1 : index
    %c0_108 = arith.constant 0 : index
    %c11_109 = arith.constant 11 : index
    %253 = vector.load %arg2[%c1_107, %c0_108, %c11_109] : memref<4x28x28xf32, #tpu.memory_space<vmem>>, vector<1x28x16xf32>
    %254 = vector.shape_cast %253 : vector<1x28x16xf32> to vector<28x16xf32>
    %255 = vector.broadcast %198 : f32 to vector<28x16xf32>
    %256 = arith.mulf %254, %255 : vector<28x16xf32>
    %257 = arith.addf %237, %256 : vector<28x16xf32>
    %c1_110 = arith.constant 1 : index
    %c0_111 = arith.constant 0 : index
    %c12_112 = arith.constant 12 : index
    %258 = vector.load %arg2[%c1_110, %c0_111, %c12_112] : memref<4x28x28xf32, #tpu.memory_space<vmem>>, vector<1x28x16xf32>
    %259 = vector.shape_cast %258 : vector<1x28x16xf32> to vector<28x16xf32>
    %260 = vector.broadcast %201 : f32 to vector<28x16xf32>
    %261 = arith.mulf %259, %260 : vector<28x16xf32>
    %262 = arith.addf %242, %261 : vector<28x16xf32>
    %263 = arith.addf %262, %247 : vector<28x16xf32>
    %264 = arith.addf %252, %257 : vector<28x16xf32>
    %265 = arith.addf %263, %264 : vector<28x16xf32>
    %c0_113 = arith.constant 0 : index
    %c0_114 = arith.constant 0 : index
    %266 = vector.load %arg4[%c0_113, %c0_114] : memref<28x16xf32, #tpu.memory_space<vmem>>, vector<28x16xf32>
    tpu.vector_store %arg4[%c0_113, %c0_114], %265 {strides = array<i32>} : memref<28x16xf32, #tpu.memory_space<vmem>>, vector<28x16xf32>,
    %c0_115 = arith.constant 0 : index
    %c0_116 = arith.constant 0 : index
    %267 = vector.load %arg4[%c0_115, %c0_116] : memref<28x16xf32, #tpu.memory_space<vmem>>, vector<16x16xf32>
    %268 = vector.broadcast %165 : f32 to vector<16x16xf32>
    %269 = arith.mulf %267, %268 : vector<16x16xf32>
    %c1_117 = arith.constant 1 : index
    %c0_118 = arith.constant 0 : index
    %270 = vector.load %arg4[%c1_117, %c0_118] : memref<28x16xf32, #tpu.memory_space<vmem>>, vector<16x16xf32>
    %271 = vector.broadcast %168 : f32 to vector<16x16xf32>
    %272 = arith.mulf %270, %271 : vector<16x16xf32>
    %c2_119 = arith.constant 2 : index
    %c0_120 = arith.constant 0 : index
    %273 = vector.load %arg4[%c2_119, %c0_120] : memref<28x16xf32, #tpu.memory_space<vmem>>, vector<16x16xf32>
    %274 = vector.broadcast %171 : f32 to vector<16x16xf32>
    %275 = arith.mulf %273, %274 : vector<16x16xf32>
    %c3_121 = arith.constant 3 : index
    %c0_122 = arith.constant 0 : index
    %276 = vector.load %arg4[%c3_121, %c0_122] : memref<28x16xf32, #tpu.memory_space<vmem>>, vector<16x16xf32>
    %277 = vector.broadcast %174 : f32 to vector<16x16xf32>
    %278 = arith.mulf %276, %277 : vector<16x16xf32>
    %c4_123 = arith.constant 4 : index
    %c0_124 = arith.constant 0 : index
    %279 = vector.load %arg4[%c4_123, %c0_124] : memref<28x16xf32, #tpu.memory_space<vmem>>, vector<16x16xf32>
    %280 = vector.broadcast %177 : f32 to vector<16x16xf32>
    %281 = arith.mulf %279, %280 : vector<16x16xf32>
    %282 = arith.addf %269, %281 : vector<16x16xf32>
    %c5_125 = arith.constant 5 : index
    %c0_126 = arith.constant 0 : index
    %283 = vector.load %arg4[%c5_125, %c0_126] : memref<28x16xf32, #tpu.memory_space<vmem>>, vector<16x16xf32>
    %284 = vector.broadcast %180 : f32 to vector<16x16xf32>
    %285 = arith.mulf %283, %284 : vector<16x16xf32>
    %286 = arith.addf %272, %285 : vector<16x16xf32>
    %c6_127 = arith.constant 6 : index
    %c0_128 = arith.constant 0 : index
    %287 = vector.load %arg4[%c6_127, %c0_128] : memref<28x16xf32, #tpu.memory_space<vmem>>, vector<16x16xf32>
    %288 = vector.broadcast %183 : f32 to vector<16x16xf32>
    %289 = arith.mulf %287, %288 : vector<16x16xf32>
    %290 = arith.addf %275, %289 : vector<16x16xf32>
    %c7_129 = arith.constant 7 : index
    %c0_130 = arith.constant 0 : index
    %291 = vector.load %arg4[%c7_129, %c0_130] : memref<28x16xf32, #tpu.memory_space<vmem>>, vector<16x16xf32>
    %292 = vector.broadcast %186 : f32 to vector<16x16xf32>
    %293 = arith.mulf %291, %292 : vector<16x16xf32>
    %294 = arith.addf %278, %293 : vector<16x16xf32>
    %c8_131 = arith.constant 8 : index
    %c0_132 = arith.constant 0 : index
    %295 = vector.load %arg4[%c8_131, %c0_132] : memref<28x16xf32, #tpu.memory_space<vmem>>, vector<16x16xf32>
    %296 = vector.broadcast %189 : f32 to vector<16x16xf32>
    %297 = arith.mulf %295, %296 : vector<16x16xf32>
    %298 = arith.addf %282, %297 : vector<16x16xf32>
    %c9_133 = arith.constant 9 : index
    %c0_134 = arith.constant 0 : index
    %299 = vector.load %arg4[%c9_133, %c0_134] : memref<28x16xf32, #tpu.memory_space<vmem>>, vector<16x16xf32>
    %300 = vector.broadcast %192 : f32 to vector<16x16xf32>
    %301 = arith.mulf %299, %300 : vector<16x16xf32>
    %302 = arith.addf %286, %301 : vector<16x16xf32>
    %c10_135 = arith.constant 10 : index
    %c0_136 = arith.constant 0 : index
    %303 = vector.load %arg4[%c10_135, %c0_136] : memref<28x16xf32, #tpu.memory_space<vmem>>, vector<16x16xf32>
    %304 = vector.broadcast %195 : f32 to vector<16x16xf32>
    %305 = arith.mulf %303, %304 : vector<16x16xf32>
    %306 = arith.addf %290, %305 : vector<16x16xf32>
    %c11_137 = arith.constant 11 : index
    %c0_138 = arith.constant 0 : index
    %307 = vector.load %arg4[%c11_137, %c0_138] : memref<28x16xf32, #tpu.memory_space<vmem>>, vector<16x16xf32>
    %308 = vector.broadcast %198 : f32 to vector<16x16xf32>
    %309 = arith.mulf %307, %308 : vector<16x16xf32>
    %310 = arith.addf %294, %309 : vector<16x16xf32>
    %c12_139 = arith.constant 12 : index
    %c0_140 = arith.constant 0 : index
    %311 = vector.load %arg4[%c12_139, %c0_140] : memref<28x16xf32, #tpu.memory_space<vmem>>, vector<16x16xf32>
    %312 = vector.broadcast %201 : f32 to vector<16x16xf32>
    %313 = arith.mulf %311, %312 : vector<16x16xf32>
    %314 = arith.addf %298, %313 : vector<16x16xf32>
    %315 = arith.addf %314, %302 : vector<16x16xf32>
    %316 = arith.addf %306, %310 : vector<16x16xf32>
    %317 = arith.addf %315, %316 : vector<16x16xf32>
    %c1_141 = arith.constant 1 : index
    %c0_142 = arith.constant 0 : index
    %c0_143 = arith.constant 0 : index
    %318 = vector.load %arg3[%c1_141, %c0_142, %c0_143] : memref<4x16x16xf32, #tpu.memory_space<vmem>>, vector<1x16x16xf32>
    %319 = vector.shape_cast %318 : vector<1x16x16xf32> to vector<16x16xf32>
    %320 = vector.shape_cast %317 : vector<16x16xf32> to vector<1x16x16xf32>
    tpu.vector_store %arg3[%c1_141, %c0_142, %c0_143], %320 {strides = array<i32>} : memref<4x16x16xf32, #tpu.memory_space<vmem>>, vector<1x16x16xf32>,
    %c2_i32_144 = arith.constant 2 : i32
    %321 = arith.addi %0, %c2_i32_144 : i32
    %c13_i32_145 = arith.constant 13 : i32
    %322 = arith.muli %321, %c13_i32_145 : i32
    %c0_i32_146 = arith.constant 0 : i32
    %323 = arith.addi %322, %c0_i32_146 : i32
    %324 = arith.index_cast %323 : i32 to index
    %325 = memref.load %arg1[%324] : memref<52xf32, #tpu.memory_space<smem>>
    %c1_i32_147 = arith.constant 1 : i32
    %326 = arith.addi %322, %c1_i32_147 : i32
    %327 = arith.index_cast %326 : i32 to index
    %328 = memref.load %arg1[%327] : memref<52xf32, #tpu.memory_space<smem>>
    %c2_i32_148 = arith.constant 2 : i32
    %329 = arith.addi %322, %c2_i32_148 : i32
    %330 = arith.index_cast %329 : i32 to index
    %331 = memref.load %arg1[%330] : memref<52xf32, #tpu.memory_space<smem>>
    %c3_i32_149 = arith.constant 3 : i32
    %332 = arith.addi %322, %c3_i32_149 : i32
    %333 = arith.index_cast %332 : i32 to index
    %334 = memref.load %arg1[%333] : memref<52xf32, #tpu.memory_space<smem>>
    %c4_i32_150 = arith.constant 4 : i32
    %335 = arith.addi %322, %c4_i32_150 : i32
    %336 = arith.index_cast %335 : i32 to index
    %337 = memref.load %arg1[%336] : memref<52xf32, #tpu.memory_space<smem>>
    %c5_i32_151 = arith.constant 5 : i32
    %338 = arith.addi %322, %c5_i32_151 : i32
    %339 = arith.index_cast %338 : i32 to index
    %340 = memref.load %arg1[%339] : memref<52xf32, #tpu.memory_space<smem>>
    %c6_i32_152 = arith.constant 6 : i32
    %341 = arith.addi %322, %c6_i32_152 : i32
    %342 = arith.index_cast %341 : i32 to index
    %343 = memref.load %arg1[%342] : memref<52xf32, #tpu.memory_space<smem>>
    %c7_i32_153 = arith.constant 7 : i32
    %344 = arith.addi %322, %c7_i32_153 : i32
    %345 = arith.index_cast %344 : i32 to index
    %346 = memref.load %arg1[%345] : memref<52xf32, #tpu.memory_space<smem>>
    %c8_i32_154 = arith.constant 8 : i32
    %347 = arith.addi %322, %c8_i32_154 : i32
    %348 = arith.index_cast %347 : i32 to index
    %349 = memref.load %arg1[%348] : memref<52xf32, #tpu.memory_space<smem>>
    %c9_i32_155 = arith.constant 9 : i32
    %350 = arith.addi %322, %c9_i32_155 : i32
    %351 = arith.index_cast %350 : i32 to index
    %352 = memref.load %arg1[%351] : memref<52xf32, #tpu.memory_space<smem>>
    %c10_i32_156 = arith.constant 10 : i32
    %353 = arith.addi %322, %c10_i32_156 : i32
    %354 = arith.index_cast %353 : i32 to index
    %355 = memref.load %arg1[%354] : memref<52xf32, #tpu.memory_space<smem>>
    %c11_i32_157 = arith.constant 11 : i32
    %356 = arith.addi %322, %c11_i32_157 : i32
    %357 = arith.index_cast %356 : i32 to index
    %358 = memref.load %arg1[%357] : memref<52xf32, #tpu.memory_space<smem>>
    %c12_i32_158 = arith.constant 12 : i32
    %359 = arith.addi %322, %c12_i32_158 : i32
    %360 = arith.index_cast %359 : i32 to index
    %361 = memref.load %arg1[%360] : memref<52xf32, #tpu.memory_space<smem>>
    %c2_159 = arith.constant 2 : index
    %c0_160 = arith.constant 0 : index
    %c0_161 = arith.constant 0 : index
    %362 = vector.load %arg2[%c2_159, %c0_160, %c0_161] : memref<4x28x28xf32, #tpu.memory_space<vmem>>, vector<1x28x16xf32>
    %363 = vector.shape_cast %362 : vector<1x28x16xf32> to vector<28x16xf32>
    %364 = vector.broadcast %325 : f32 to vector<28x16xf32>
    %365 = arith.mulf %363, %364 : vector<28x16xf32>
    %c2_162 = arith.constant 2 : index
    %c0_163 = arith.constant 0 : index
    %c1_164 = arith.constant 1 : index
    %366 = vector.load %arg2[%c2_162, %c0_163, %c1_164] : memref<4x28x28xf32, #tpu.memory_space<vmem>>, vector<1x28x16xf32>
    %367 = vector.shape_cast %366 : vector<1x28x16xf32> to vector<28x16xf32>
    %368 = vector.broadcast %328 : f32 to vector<28x16xf32>
    %369 = arith.mulf %367, %368 : vector<28x16xf32>
    %c2_165 = arith.constant 2 : index
    %c0_166 = arith.constant 0 : index
    %c2_167 = arith.constant 2 : index
    %370 = vector.load %arg2[%c2_165, %c0_166, %c2_167] : memref<4x28x28xf32, #tpu.memory_space<vmem>>, vector<1x28x16xf32>
    %371 = vector.shape_cast %370 : vector<1x28x16xf32> to vector<28x16xf32>
    %372 = vector.broadcast %331 : f32 to vector<28x16xf32>
    %373 = arith.mulf %371, %372 : vector<28x16xf32>
    %c2_168 = arith.constant 2 : index
    %c0_169 = arith.constant 0 : index
    %c3_170 = arith.constant 3 : index
    %374 = vector.load %arg2[%c2_168, %c0_169, %c3_170] : memref<4x28x28xf32, #tpu.memory_space<vmem>>, vector<1x28x16xf32>
    %375 = vector.shape_cast %374 : vector<1x28x16xf32> to vector<28x16xf32>
    %376 = vector.broadcast %334 : f32 to vector<28x16xf32>
    %377 = arith.mulf %375, %376 : vector<28x16xf32>
    %c2_171 = arith.constant 2 : index
    %c0_172 = arith.constant 0 : index
    %c4_173 = arith.constant 4 : index
    %378 = vector.load %arg2[%c2_171, %c0_172, %c4_173] : memref<4x28x28xf32, #tpu.memory_space<vmem>>, vector<1x28x16xf32>
    %379 = vector.shape_cast %378 : vector<1x28x16xf32> to vector<28x16xf32>
    %380 = vector.broadcast %337 : f32 to vector<28x16xf32>
    %381 = arith.mulf %379, %380 : vector<28x16xf32>
    %382 = arith.addf %365, %381 : vector<28x16xf32>
    %c2_174 = arith.constant 2 : index
    %c0_175 = arith.constant 0 : index
    %c5_176 = arith.constant 5 : index
    %383 = vector.load %arg2[%c2_174, %c0_175, %c5_176] : memref<4x28x28xf32, #tpu.memory_space<vmem>>, vector<1x28x16xf32>
    %384 = vector.shape_cast %383 : vector<1x28x16xf32> to vector<28x16xf32>
    %385 = vector.broadcast %340 : f32 to vector<28x16xf32>
    %386 = arith.mulf %384, %385 : vector<28x16xf32>
    %387 = arith.addf %369, %386 : vector<28x16xf32>
    %c2_177 = arith.constant 2 : index
    %c0_178 = arith.constant 0 : index
    %c6_179 = arith.constant 6 : index
    %388 = vector.load %arg2[%c2_177, %c0_178, %c6_179] : memref<4x28x28xf32, #tpu.memory_space<vmem>>, vector<1x28x16xf32>
    %389 = vector.shape_cast %388 : vector<1x28x16xf32> to vector<28x16xf32>
    %390 = vector.broadcast %343 : f32 to vector<28x16xf32>
    %391 = arith.mulf %389, %390 : vector<28x16xf32>
    %392 = arith.addf %373, %391 : vector<28x16xf32>
    %c2_180 = arith.constant 2 : index
    %c0_181 = arith.constant 0 : index
    %c7_182 = arith.constant 7 : index
    %393 = vector.load %arg2[%c2_180, %c0_181, %c7_182] : memref<4x28x28xf32, #tpu.memory_space<vmem>>, vector<1x28x16xf32>
    %394 = vector.shape_cast %393 : vector<1x28x16xf32> to vector<28x16xf32>
    %395 = vector.broadcast %346 : f32 to vector<28x16xf32>
    %396 = arith.mulf %394, %395 : vector<28x16xf32>
    %397 = arith.addf %377, %396 : vector<28x16xf32>
    %c2_183 = arith.constant 2 : index
    %c0_184 = arith.constant 0 : index
    %c8_185 = arith.constant 8 : index
    %398 = vector.load %arg2[%c2_183, %c0_184, %c8_185] : memref<4x28x28xf32, #tpu.memory_space<vmem>>, vector<1x28x16xf32>
    %399 = vector.shape_cast %398 : vector<1x28x16xf32> to vector<28x16xf32>
    %400 = vector.broadcast %349 : f32 to vector<28x16xf32>
    %401 = arith.mulf %399, %400 : vector<28x16xf32>
    %402 = arith.addf %382, %401 : vector<28x16xf32>
    %c2_186 = arith.constant 2 : index
    %c0_187 = arith.constant 0 : index
    %c9_188 = arith.constant 9 : index
    %403 = vector.load %arg2[%c2_186, %c0_187, %c9_188] : memref<4x28x28xf32, #tpu.memory_space<vmem>>, vector<1x28x16xf32>
    %404 = vector.shape_cast %403 : vector<1x28x16xf32> to vector<28x16xf32>
    %405 = vector.broadcast %352 : f32 to vector<28x16xf32>
    %406 = arith.mulf %404, %405 : vector<28x16xf32>
    %407 = arith.addf %387, %406 : vector<28x16xf32>
    %c2_189 = arith.constant 2 : index
    %c0_190 = arith.constant 0 : index
    %c10_191 = arith.constant 10 : index
    %408 = vector.load %arg2[%c2_189, %c0_190, %c10_191] : memref<4x28x28xf32, #tpu.memory_space<vmem>>, vector<1x28x16xf32>
    %409 = vector.shape_cast %408 : vector<1x28x16xf32> to vector<28x16xf32>
    %410 = vector.broadcast %355 : f32 to vector<28x16xf32>
    %411 = arith.mulf %409, %410 : vector<28x16xf32>
    %412 = arith.addf %392, %411 : vector<28x16xf32>
    %c2_192 = arith.constant 2 : index
    %c0_193 = arith.constant 0 : index
    %c11_194 = arith.constant 11 : index
    %413 = vector.load %arg2[%c2_192, %c0_193, %c11_194] : memref<4x28x28xf32, #tpu.memory_space<vmem>>, vector<1x28x16xf32>
    %414 = vector.shape_cast %413 : vector<1x28x16xf32> to vector<28x16xf32>
    %415 = vector.broadcast %358 : f32 to vector<28x16xf32>
    %416 = arith.mulf %414, %415 : vector<28x16xf32>
    %417 = arith.addf %397, %416 : vector<28x16xf32>
    %c2_195 = arith.constant 2 : index
    %c0_196 = arith.constant 0 : index
    %c12_197 = arith.constant 12 : index
    %418 = vector.load %arg2[%c2_195, %c0_196, %c12_197] : memref<4x28x28xf32, #tpu.memory_space<vmem>>, vector<1x28x16xf32>
    %419 = vector.shape_cast %418 : vector<1x28x16xf32> to vector<28x16xf32>
    %420 = vector.broadcast %361 : f32 to vector<28x16xf32>
    %421 = arith.mulf %419, %420 : vector<28x16xf32>
    %422 = arith.addf %402, %421 : vector<28x16xf32>
    %423 = arith.addf %422, %407 : vector<28x16xf32>
    %424 = arith.addf %412, %417 : vector<28x16xf32>
    %425 = arith.addf %423, %424 : vector<28x16xf32>
    %c0_198 = arith.constant 0 : index
    %c0_199 = arith.constant 0 : index
    %426 = vector.load %arg4[%c0_198, %c0_199] : memref<28x16xf32, #tpu.memory_space<vmem>>, vector<28x16xf32>
    tpu.vector_store %arg4[%c0_198, %c0_199], %425 {strides = array<i32>} : memref<28x16xf32, #tpu.memory_space<vmem>>, vector<28x16xf32>,
    %c0_200 = arith.constant 0 : index
    %c0_201 = arith.constant 0 : index
    %427 = vector.load %arg4[%c0_200, %c0_201] : memref<28x16xf32, #tpu.memory_space<vmem>>, vector<16x16xf32>
    %428 = vector.broadcast %325 : f32 to vector<16x16xf32>
    %429 = arith.mulf %427, %428 : vector<16x16xf32>
    %c1_202 = arith.constant 1 : index
    %c0_203 = arith.constant 0 : index
    %430 = vector.load %arg4[%c1_202, %c0_203] : memref<28x16xf32, #tpu.memory_space<vmem>>, vector<16x16xf32>
    %431 = vector.broadcast %328 : f32 to vector<16x16xf32>
    %432 = arith.mulf %430, %431 : vector<16x16xf32>
    %c2_204 = arith.constant 2 : index
    %c0_205 = arith.constant 0 : index
    %433 = vector.load %arg4[%c2_204, %c0_205] : memref<28x16xf32, #tpu.memory_space<vmem>>, vector<16x16xf32>
    %434 = vector.broadcast %331 : f32 to vector<16x16xf32>
    %435 = arith.mulf %433, %434 : vector<16x16xf32>
    %c3_206 = arith.constant 3 : index
    %c0_207 = arith.constant 0 : index
    %436 = vector.load %arg4[%c3_206, %c0_207] : memref<28x16xf32, #tpu.memory_space<vmem>>, vector<16x16xf32>
    %437 = vector.broadcast %334 : f32 to vector<16x16xf32>
    %438 = arith.mulf %436, %437 : vector<16x16xf32>
    %c4_208 = arith.constant 4 : index
    %c0_209 = arith.constant 0 : index
    %439 = vector.load %arg4[%c4_208, %c0_209] : memref<28x16xf32, #tpu.memory_space<vmem>>, vector<16x16xf32>
    %440 = vector.broadcast %337 : f32 to vector<16x16xf32>
    %441 = arith.mulf %439, %440 : vector<16x16xf32>
    %442 = arith.addf %429, %441 : vector<16x16xf32>
    %c5_210 = arith.constant 5 : index
    %c0_211 = arith.constant 0 : index
    %443 = vector.load %arg4[%c5_210, %c0_211] : memref<28x16xf32, #tpu.memory_space<vmem>>, vector<16x16xf32>
    %444 = vector.broadcast %340 : f32 to vector<16x16xf32>
    %445 = arith.mulf %443, %444 : vector<16x16xf32>
    %446 = arith.addf %432, %445 : vector<16x16xf32>
    %c6_212 = arith.constant 6 : index
    %c0_213 = arith.constant 0 : index
    %447 = vector.load %arg4[%c6_212, %c0_213] : memref<28x16xf32, #tpu.memory_space<vmem>>, vector<16x16xf32>
    %448 = vector.broadcast %343 : f32 to vector<16x16xf32>
    %449 = arith.mulf %447, %448 : vector<16x16xf32>
    %450 = arith.addf %435, %449 : vector<16x16xf32>
    %c7_214 = arith.constant 7 : index
    %c0_215 = arith.constant 0 : index
    %451 = vector.load %arg4[%c7_214, %c0_215] : memref<28x16xf32, #tpu.memory_space<vmem>>, vector<16x16xf32>
    %452 = vector.broadcast %346 : f32 to vector<16x16xf32>
    %453 = arith.mulf %451, %452 : vector<16x16xf32>
    %454 = arith.addf %438, %453 : vector<16x16xf32>
    %c8_216 = arith.constant 8 : index
    %c0_217 = arith.constant 0 : index
    %455 = vector.load %arg4[%c8_216, %c0_217] : memref<28x16xf32, #tpu.memory_space<vmem>>, vector<16x16xf32>
    %456 = vector.broadcast %349 : f32 to vector<16x16xf32>
    %457 = arith.mulf %455, %456 : vector<16x16xf32>
    %458 = arith.addf %442, %457 : vector<16x16xf32>
    %c9_218 = arith.constant 9 : index
    %c0_219 = arith.constant 0 : index
    %459 = vector.load %arg4[%c9_218, %c0_219] : memref<28x16xf32, #tpu.memory_space<vmem>>, vector<16x16xf32>
    %460 = vector.broadcast %352 : f32 to vector<16x16xf32>
    %461 = arith.mulf %459, %460 : vector<16x16xf32>
    %462 = arith.addf %446, %461 : vector<16x16xf32>
    %c10_220 = arith.constant 10 : index
    %c0_221 = arith.constant 0 : index
    %463 = vector.load %arg4[%c10_220, %c0_221] : memref<28x16xf32, #tpu.memory_space<vmem>>, vector<16x16xf32>
    %464 = vector.broadcast %355 : f32 to vector<16x16xf32>
    %465 = arith.mulf %463, %464 : vector<16x16xf32>
    %466 = arith.addf %450, %465 : vector<16x16xf32>
    %c11_222 = arith.constant 11 : index
    %c0_223 = arith.constant 0 : index
    %467 = vector.load %arg4[%c11_222, %c0_223] : memref<28x16xf32, #tpu.memory_space<vmem>>, vector<16x16xf32>
    %468 = vector.broadcast %358 : f32 to vector<16x16xf32>
    %469 = arith.mulf %467, %468 : vector<16x16xf32>
    %470 = arith.addf %454, %469 : vector<16x16xf32>
    %c12_224 = arith.constant 12 : index
    %c0_225 = arith.constant 0 : index
    %471 = vector.load %arg4[%c12_224, %c0_225] : memref<28x16xf32, #tpu.memory_space<vmem>>, vector<16x16xf32>
    %472 = vector.broadcast %361 : f32 to vector<16x16xf32>
    %473 = arith.mulf %471, %472 : vector<16x16xf32>
    %474 = arith.addf %458, %473 : vector<16x16xf32>
    %475 = arith.addf %474, %462 : vector<16x16xf32>
    %476 = arith.addf %466, %470 : vector<16x16xf32>
    %477 = arith.addf %475, %476 : vector<16x16xf32>
    %c2_226 = arith.constant 2 : index
    %c0_227 = arith.constant 0 : index
    %c0_228 = arith.constant 0 : index
    %478 = vector.load %arg3[%c2_226, %c0_227, %c0_228] : memref<4x16x16xf32, #tpu.memory_space<vmem>>, vector<1x16x16xf32>
    %479 = vector.shape_cast %478 : vector<1x16x16xf32> to vector<16x16xf32>
    %480 = vector.shape_cast %477 : vector<16x16xf32> to vector<1x16x16xf32>
    tpu.vector_store %arg3[%c2_226, %c0_227, %c0_228], %480 {strides = array<i32>} : memref<4x16x16xf32, #tpu.memory_space<vmem>>, vector<1x16x16xf32>,
    %c3_i32_229 = arith.constant 3 : i32
    %481 = arith.addi %0, %c3_i32_229 : i32
    %c13_i32_230 = arith.constant 13 : i32
    %482 = arith.muli %481, %c13_i32_230 : i32
    %c0_i32_231 = arith.constant 0 : i32
    %483 = arith.addi %482, %c0_i32_231 : i32
    %484 = arith.index_cast %483 : i32 to index
    %485 = memref.load %arg1[%484] : memref<52xf32, #tpu.memory_space<smem>>
    %c1_i32_232 = arith.constant 1 : i32
    %486 = arith.addi %482, %c1_i32_232 : i32
    %487 = arith.index_cast %486 : i32 to index
    %488 = memref.load %arg1[%487] : memref<52xf32, #tpu.memory_space<smem>>
    %c2_i32_233 = arith.constant 2 : i32
    %489 = arith.addi %482, %c2_i32_233 : i32
    %490 = arith.index_cast %489 : i32 to index
    %491 = memref.load %arg1[%490] : memref<52xf32, #tpu.memory_space<smem>>
    %c3_i32_234 = arith.constant 3 : i32
    %492 = arith.addi %482, %c3_i32_234 : i32
    %493 = arith.index_cast %492 : i32 to index
    %494 = memref.load %arg1[%493] : memref<52xf32, #tpu.memory_space<smem>>
    %c4_i32_235 = arith.constant 4 : i32
    %495 = arith.addi %482, %c4_i32_235 : i32
    %496 = arith.index_cast %495 : i32 to index
    %497 = memref.load %arg1[%496] : memref<52xf32, #tpu.memory_space<smem>>
    %c5_i32_236 = arith.constant 5 : i32
    %498 = arith.addi %482, %c5_i32_236 : i32
    %499 = arith.index_cast %498 : i32 to index
    %500 = memref.load %arg1[%499] : memref<52xf32, #tpu.memory_space<smem>>
    %c6_i32_237 = arith.constant 6 : i32
    %501 = arith.addi %482, %c6_i32_237 : i32
    %502 = arith.index_cast %501 : i32 to index
    %503 = memref.load %arg1[%502] : memref<52xf32, #tpu.memory_space<smem>>
    %c7_i32_238 = arith.constant 7 : i32
    %504 = arith.addi %482, %c7_i32_238 : i32
    %505 = arith.index_cast %504 : i32 to index
    %506 = memref.load %arg1[%505] : memref<52xf32, #tpu.memory_space<smem>>
    %c8_i32_239 = arith.constant 8 : i32
    %507 = arith.addi %482, %c8_i32_239 : i32
    %508 = arith.index_cast %507 : i32 to index
    %509 = memref.load %arg1[%508] : memref<52xf32, #tpu.memory_space<smem>>
    %c9_i32_240 = arith.constant 9 : i32
    %510 = arith.addi %482, %c9_i32_240 : i32
    %511 = arith.index_cast %510 : i32 to index
    %512 = memref.load %arg1[%511] : memref<52xf32, #tpu.memory_space<smem>>
    %c10_i32_241 = arith.constant 10 : i32
    %513 = arith.addi %482, %c10_i32_241 : i32
    %514 = arith.index_cast %513 : i32 to index
    %515 = memref.load %arg1[%514] : memref<52xf32, #tpu.memory_space<smem>>
    %c11_i32_242 = arith.constant 11 : i32
    %516 = arith.addi %482, %c11_i32_242 : i32
    %517 = arith.index_cast %516 : i32 to index
    %518 = memref.load %arg1[%517] : memref<52xf32, #tpu.memory_space<smem>>
    %c12_i32_243 = arith.constant 12 : i32
    %519 = arith.addi %482, %c12_i32_243 : i32
    %520 = arith.index_cast %519 : i32 to index
    %521 = memref.load %arg1[%520] : memref<52xf32, #tpu.memory_space<smem>>
    %c3_244 = arith.constant 3 : index
    %c0_245 = arith.constant 0 : index
    %c0_246 = arith.constant 0 : index
    %522 = vector.load %arg2[%c3_244, %c0_245, %c0_246] : memref<4x28x28xf32, #tpu.memory_space<vmem>>, vector<1x28x16xf32>
    %523 = vector.shape_cast %522 : vector<1x28x16xf32> to vector<28x16xf32>
    %524 = vector.broadcast %485 : f32 to vector<28x16xf32>
    %525 = arith.mulf %523, %524 : vector<28x16xf32>
    %c3_247 = arith.constant 3 : index
    %c0_248 = arith.constant 0 : index
    %c1_249 = arith.constant 1 : index
    %526 = vector.load %arg2[%c3_247, %c0_248, %c1_249] : memref<4x28x28xf32, #tpu.memory_space<vmem>>, vector<1x28x16xf32>
    %527 = vector.shape_cast %526 : vector<1x28x16xf32> to vector<28x16xf32>
    %528 = vector.broadcast %488 : f32 to vector<28x16xf32>
    %529 = arith.mulf %527, %528 : vector<28x16xf32>
    %c3_250 = arith.constant 3 : index
    %c0_251 = arith.constant 0 : index
    %c2_252 = arith.constant 2 : index
    %530 = vector.load %arg2[%c3_250, %c0_251, %c2_252] : memref<4x28x28xf32, #tpu.memory_space<vmem>>, vector<1x28x16xf32>
    %531 = vector.shape_cast %530 : vector<1x28x16xf32> to vector<28x16xf32>
    %532 = vector.broadcast %491 : f32 to vector<28x16xf32>
    %533 = arith.mulf %531, %532 : vector<28x16xf32>
    %c3_253 = arith.constant 3 : index
    %c0_254 = arith.constant 0 : index
    %c3_255 = arith.constant 3 : index
    %534 = vector.load %arg2[%c3_253, %c0_254, %c3_255] : memref<4x28x28xf32, #tpu.memory_space<vmem>>, vector<1x28x16xf32>
    %535 = vector.shape_cast %534 : vector<1x28x16xf32> to vector<28x16xf32>
    %536 = vector.broadcast %494 : f32 to vector<28x16xf32>
    %537 = arith.mulf %535, %536 : vector<28x16xf32>
    %c3_256 = arith.constant 3 : index
    %c0_257 = arith.constant 0 : index
    %c4_258 = arith.constant 4 : index
    %538 = vector.load %arg2[%c3_256, %c0_257, %c4_258] : memref<4x28x28xf32, #tpu.memory_space<vmem>>, vector<1x28x16xf32>
    %539 = vector.shape_cast %538 : vector<1x28x16xf32> to vector<28x16xf32>
    %540 = vector.broadcast %497 : f32 to vector<28x16xf32>
    %541 = arith.mulf %539, %540 : vector<28x16xf32>
    %542 = arith.addf %525, %541 : vector<28x16xf32>
    %c3_259 = arith.constant 3 : index
    %c0_260 = arith.constant 0 : index
    %c5_261 = arith.constant 5 : index
    %543 = vector.load %arg2[%c3_259, %c0_260, %c5_261] : memref<4x28x28xf32, #tpu.memory_space<vmem>>, vector<1x28x16xf32>
    %544 = vector.shape_cast %543 : vector<1x28x16xf32> to vector<28x16xf32>
    %545 = vector.broadcast %500 : f32 to vector<28x16xf32>
    %546 = arith.mulf %544, %545 : vector<28x16xf32>
    %547 = arith.addf %529, %546 : vector<28x16xf32>
    %c3_262 = arith.constant 3 : index
    %c0_263 = arith.constant 0 : index
    %c6_264 = arith.constant 6 : index
    %548 = vector.load %arg2[%c3_262, %c0_263, %c6_264] : memref<4x28x28xf32, #tpu.memory_space<vmem>>, vector<1x28x16xf32>
    %549 = vector.shape_cast %548 : vector<1x28x16xf32> to vector<28x16xf32>
    %550 = vector.broadcast %503 : f32 to vector<28x16xf32>
    %551 = arith.mulf %549, %550 : vector<28x16xf32>
    %552 = arith.addf %533, %551 : vector<28x16xf32>
    %c3_265 = arith.constant 3 : index
    %c0_266 = arith.constant 0 : index
    %c7_267 = arith.constant 7 : index
    %553 = vector.load %arg2[%c3_265, %c0_266, %c7_267] : memref<4x28x28xf32, #tpu.memory_space<vmem>>, vector<1x28x16xf32>
    %554 = vector.shape_cast %553 : vector<1x28x16xf32> to vector<28x16xf32>
    %555 = vector.broadcast %506 : f32 to vector<28x16xf32>
    %556 = arith.mulf %554, %555 : vector<28x16xf32>
    %557 = arith.addf %537, %556 : vector<28x16xf32>
    %c3_268 = arith.constant 3 : index
    %c0_269 = arith.constant 0 : index
    %c8_270 = arith.constant 8 : index
    %558 = vector.load %arg2[%c3_268, %c0_269, %c8_270] : memref<4x28x28xf32, #tpu.memory_space<vmem>>, vector<1x28x16xf32>
    %559 = vector.shape_cast %558 : vector<1x28x16xf32> to vector<28x16xf32>
    %560 = vector.broadcast %509 : f32 to vector<28x16xf32>
    %561 = arith.mulf %559, %560 : vector<28x16xf32>
    %562 = arith.addf %542, %561 : vector<28x16xf32>
    %c3_271 = arith.constant 3 : index
    %c0_272 = arith.constant 0 : index
    %c9_273 = arith.constant 9 : index
    %563 = vector.load %arg2[%c3_271, %c0_272, %c9_273] : memref<4x28x28xf32, #tpu.memory_space<vmem>>, vector<1x28x16xf32>
    %564 = vector.shape_cast %563 : vector<1x28x16xf32> to vector<28x16xf32>
    %565 = vector.broadcast %512 : f32 to vector<28x16xf32>
    %566 = arith.mulf %564, %565 : vector<28x16xf32>
    %567 = arith.addf %547, %566 : vector<28x16xf32>
    %c3_274 = arith.constant 3 : index
    %c0_275 = arith.constant 0 : index
    %c10_276 = arith.constant 10 : index
    %568 = vector.load %arg2[%c3_274, %c0_275, %c10_276] : memref<4x28x28xf32, #tpu.memory_space<vmem>>, vector<1x28x16xf32>
    %569 = vector.shape_cast %568 : vector<1x28x16xf32> to vector<28x16xf32>
    %570 = vector.broadcast %515 : f32 to vector<28x16xf32>
    %571 = arith.mulf %569, %570 : vector<28x16xf32>
    %572 = arith.addf %552, %571 : vector<28x16xf32>
    %c3_277 = arith.constant 3 : index
    %c0_278 = arith.constant 0 : index
    %c11_279 = arith.constant 11 : index
    %573 = vector.load %arg2[%c3_277, %c0_278, %c11_279] : memref<4x28x28xf32, #tpu.memory_space<vmem>>, vector<1x28x16xf32>
    %574 = vector.shape_cast %573 : vector<1x28x16xf32> to vector<28x16xf32>
    %575 = vector.broadcast %518 : f32 to vector<28x16xf32>
    %576 = arith.mulf %574, %575 : vector<28x16xf32>
    %577 = arith.addf %557, %576 : vector<28x16xf32>
    %c3_280 = arith.constant 3 : index
    %c0_281 = arith.constant 0 : index
    %c12_282 = arith.constant 12 : index
    %578 = vector.load %arg2[%c3_280, %c0_281, %c12_282] : memref<4x28x28xf32, #tpu.memory_space<vmem>>, vector<1x28x16xf32>
    %579 = vector.shape_cast %578 : vector<1x28x16xf32> to vector<28x16xf32>
    %580 = vector.broadcast %521 : f32 to vector<28x16xf32>
    %581 = arith.mulf %579, %580 : vector<28x16xf32>
    %582 = arith.addf %562, %581 : vector<28x16xf32>
    %583 = arith.addf %582, %567 : vector<28x16xf32>
    %584 = arith.addf %572, %577 : vector<28x16xf32>
    %585 = arith.addf %583, %584 : vector<28x16xf32>
    %c0_283 = arith.constant 0 : index
    %c0_284 = arith.constant 0 : index
    %586 = vector.load %arg4[%c0_283, %c0_284] : memref<28x16xf32, #tpu.memory_space<vmem>>, vector<28x16xf32>
    tpu.vector_store %arg4[%c0_283, %c0_284], %585 {strides = array<i32>} : memref<28x16xf32, #tpu.memory_space<vmem>>, vector<28x16xf32>,
    %c0_285 = arith.constant 0 : index
    %c0_286 = arith.constant 0 : index
    %587 = vector.load %arg4[%c0_285, %c0_286] : memref<28x16xf32, #tpu.memory_space<vmem>>, vector<16x16xf32>
    %588 = vector.broadcast %485 : f32 to vector<16x16xf32>
    %589 = arith.mulf %587, %588 : vector<16x16xf32>
    %c1_287 = arith.constant 1 : index
    %c0_288 = arith.constant 0 : index
    %590 = vector.load %arg4[%c1_287, %c0_288] : memref<28x16xf32, #tpu.memory_space<vmem>>, vector<16x16xf32>
    %591 = vector.broadcast %488 : f32 to vector<16x16xf32>
    %592 = arith.mulf %590, %591 : vector<16x16xf32>
    %c2_289 = arith.constant 2 : index
    %c0_290 = arith.constant 0 : index
    %593 = vector.load %arg4[%c2_289, %c0_290] : memref<28x16xf32, #tpu.memory_space<vmem>>, vector<16x16xf32>
    %594 = vector.broadcast %491 : f32 to vector<16x16xf32>
    %595 = arith.mulf %593, %594 : vector<16x16xf32>
    %c3_291 = arith.constant 3 : index
    %c0_292 = arith.constant 0 : index
    %596 = vector.load %arg4[%c3_291, %c0_292] : memref<28x16xf32, #tpu.memory_space<vmem>>, vector<16x16xf32>
    %597 = vector.broadcast %494 : f32 to vector<16x16xf32>
    %598 = arith.mulf %596, %597 : vector<16x16xf32>
    %c4_293 = arith.constant 4 : index
    %c0_294 = arith.constant 0 : index
    %599 = vector.load %arg4[%c4_293, %c0_294] : memref<28x16xf32, #tpu.memory_space<vmem>>, vector<16x16xf32>
    %600 = vector.broadcast %497 : f32 to vector<16x16xf32>
    %601 = arith.mulf %599, %600 : vector<16x16xf32>
    %602 = arith.addf %589, %601 : vector<16x16xf32>
    %c5_295 = arith.constant 5 : index
    %c0_296 = arith.constant 0 : index
    %603 = vector.load %arg4[%c5_295, %c0_296] : memref<28x16xf32, #tpu.memory_space<vmem>>, vector<16x16xf32>
    %604 = vector.broadcast %500 : f32 to vector<16x16xf32>
    %605 = arith.mulf %603, %604 : vector<16x16xf32>
    %606 = arith.addf %592, %605 : vector<16x16xf32>
    %c6_297 = arith.constant 6 : index
    %c0_298 = arith.constant 0 : index
    %607 = vector.load %arg4[%c6_297, %c0_298] : memref<28x16xf32, #tpu.memory_space<vmem>>, vector<16x16xf32>
    %608 = vector.broadcast %503 : f32 to vector<16x16xf32>
    %609 = arith.mulf %607, %608 : vector<16x16xf32>
    %610 = arith.addf %595, %609 : vector<16x16xf32>
    %c7_299 = arith.constant 7 : index
    %c0_300 = arith.constant 0 : index
    %611 = vector.load %arg4[%c7_299, %c0_300] : memref<28x16xf32, #tpu.memory_space<vmem>>, vector<16x16xf32>
    %612 = vector.broadcast %506 : f32 to vector<16x16xf32>
    %613 = arith.mulf %611, %612 : vector<16x16xf32>
    %614 = arith.addf %598, %613 : vector<16x16xf32>
    %c8_301 = arith.constant 8 : index
    %c0_302 = arith.constant 0 : index
    %615 = vector.load %arg4[%c8_301, %c0_302] : memref<28x16xf32, #tpu.memory_space<vmem>>, vector<16x16xf32>
    %616 = vector.broadcast %509 : f32 to vector<16x16xf32>
    %617 = arith.mulf %615, %616 : vector<16x16xf32>
    %618 = arith.addf %602, %617 : vector<16x16xf32>
    %c9_303 = arith.constant 9 : index
    %c0_304 = arith.constant 0 : index
    %619 = vector.load %arg4[%c9_303, %c0_304] : memref<28x16xf32, #tpu.memory_space<vmem>>, vector<16x16xf32>
    %620 = vector.broadcast %512 : f32 to vector<16x16xf32>
    %621 = arith.mulf %619, %620 : vector<16x16xf32>
    %622 = arith.addf %606, %621 : vector<16x16xf32>
    %c10_305 = arith.constant 10 : index
    %c0_306 = arith.constant 0 : index
    %623 = vector.load %arg4[%c10_305, %c0_306] : memref<28x16xf32, #tpu.memory_space<vmem>>, vector<16x16xf32>
    %624 = vector.broadcast %515 : f32 to vector<16x16xf32>
    %625 = arith.mulf %623, %624 : vector<16x16xf32>
    %626 = arith.addf %610, %625 : vector<16x16xf32>
    %c11_307 = arith.constant 11 : index
    %c0_308 = arith.constant 0 : index
    %627 = vector.load %arg4[%c11_307, %c0_308] : memref<28x16xf32, #tpu.memory_space<vmem>>, vector<16x16xf32>
    %628 = vector.broadcast %518 : f32 to vector<16x16xf32>
    %629 = arith.mulf %627, %628 : vector<16x16xf32>
    %630 = arith.addf %614, %629 : vector<16x16xf32>
    %c12_309 = arith.constant 12 : index
    %c0_310 = arith.constant 0 : index
    %631 = vector.load %arg4[%c12_309, %c0_310] : memref<28x16xf32, #tpu.memory_space<vmem>>, vector<16x16xf32>
    %632 = vector.broadcast %521 : f32 to vector<16x16xf32>
    %633 = arith.mulf %631, %632 : vector<16x16xf32>
    %634 = arith.addf %618, %633 : vector<16x16xf32>
    %635 = arith.addf %634, %622 : vector<16x16xf32>
    %636 = arith.addf %626, %630 : vector<16x16xf32>
    %637 = arith.addf %635, %636 : vector<16x16xf32>
    %c3_311 = arith.constant 3 : index
    %c0_312 = arith.constant 0 : index
    %c0_313 = arith.constant 0 : index
    %638 = vector.load %arg3[%c3_311, %c0_312, %c0_313] : memref<4x16x16xf32, #tpu.memory_space<vmem>>, vector<1x16x16xf32>
    %639 = vector.shape_cast %638 : vector<1x16x16xf32> to vector<16x16xf32>
    %640 = vector.shape_cast %637 : vector<16x16xf32> to vector<1x16x16xf32>
    tpu.vector_store %arg3[%c3_311, %c0_312, %c0_313], %640 {strides = array<i32>} : memref<4x16x16xf32, #tpu.memory_space<vmem>>, vector<1x16x16xf32>,
    return
  }
  func.func @transform_0(%arg0: i32) -> i32 {
    %c0_i32 = arith.constant 0 : i32
    %c0_i32_0 = arith.constant 0 : i32
    return %c0_i32 : i32
  }
  func.func @transform_1(%arg0: i32) -> (i32, i32, i32) {
    %c0_i32 = arith.constant 0 : i32
    %c0_i32_0 = arith.constant 0 : i32
    %c0_i32_1 = arith.constant 0 : i32
    return %arg0, %c0_i32, %c0_i32_0 : i32, i32, i32
  }
  func.func @transform_2(%arg0: i32) -> (i32, i32, i32) {
    %c0_i32 = arith.constant 0 : i32
    %c0_i32_0 = arith.constant 0 : i32
    %c0_i32_1 = arith.constant 0 : i32
    return %arg0, %c0_i32, %c0_i32_0 : i32, i32, i32
  }
}

</mosaic_0001>

<llo_original>
// kernel: heatmap_filter_gaussian.1
$region0: #{heatmap_filter_gaussian.1}
  #allocation0 [shape = 'u32[]', space=smem, size = 0x4, offset = 0x4, fixed_abs, tag = 'smem constant byte address 0x4 - core index']
  #allocation1 [shape = 'u32[144,128]{1,0:T(1,128)}', space=vmem, size = 0x12000, scoped, tag = 'internal scratch']
  #allocation2 [shape = 'f32[28,16]{1,0:T(8,128)}', space=vmem, size = 0x4000, scoped, tag = 'scratch operand']
  %s0 = inlined_call_operand.vmem [shape: f32[52], index: 0, kind: input, shape index: {}]
  %s1 = inlined_call_operand.vmem [shape: f32[4,28,28], index: 1, kind: input, shape index: {}]
  %s2 = inlined_call_operand.hbm [shape: f32[4,16,16], index: 2, kind: output, shape index: {}]
  %s3 = sld [smem:[#allocation0]]
  $region22: #{heatmap_filter_gaussian.1} parent=0
    _
  %s5 = ssub.s32 1, %s3
  %s6 = scalar_select 0, %s5, %s3
  $region1: #{heatmap_filter_gaussian.1} parent=0
    #allocation3 [shape = 'u8[512]{0}', space=smem, size = 0x200, scoped, tag = 'input window, operand 0, single buffered']
    #allocation4 [shape = 's32[1]{0}', space=sflag, size = 0x4, scoped, tag = 'scoped memory for heatmap_filter_gaussian.1']
    #allocation5 [shape = 's32[1]{0}', space=sflag, size = 0x4, scoped, tag = 'scoped memory for heatmap_filter_gaussian.1']
    #allocation6 [shape = 'u8[32768]{0}', space=vmem, size = 0x8000, scoped, tag = 'output window, operand 0, single buffered']
    %7 = vsyncpa [#allocation5], 0
    %8 = vsyncpa [#allocation4], 0
    // Predicated region
    $region2: #{heatmap_filter_gaussian.1} parent=1 // pred_check
      _
    $region3: #{heatmap_filter_gaussian.1} parent=1 // pred_check_branch
      %10 = sbr.rel (0) target = $region5
    $region4: #{heatmap_filter_gaussian.1} parent=1 // pred_region
      %s12 = ssub.s32 16, 16
      %13 = vsyncadd [#allocation5], %s12
      %s15 = sshll.u32 %s0, 4
      %s16 = int_to_ptr.vmem [resolvable:$true] %s15
      %18 = dma.vmem_to_smem %s16, 16, [#allocation3], [#allocation5]
    $region5: #{heatmap_filter_gaussian.1} parent=1 // pred_fallthru
      _
    // Predicated region
    $region6: #{heatmap_filter_gaussian.1} parent=1 // pred_check
      _
    $region7: #{heatmap_filter_gaussian.1} parent=1 // pred_check_branch
      %20 = sbr.rel (0) target = $region9
    $region8: #{heatmap_filter_gaussian.1} parent=1 // pred_region
      _
    $region9: #{heatmap_filter_gaussian.1} parent=1 // pred_fallthru
      _
    // Predicated region
    $region10: #{heatmap_filter_gaussian.1} parent=1 // pred_check
      _
    $region11: #{heatmap_filter_gaussian.1} parent=1 // pred_check_branch
      %22 = sbr.rel (0) target = $region13
    $region12: #{heatmap_filter_gaussian.1} parent=1 // pred_region
      %23 = dma.done [#allocation5], 16
    $region13: #{heatmap_filter_gaussian.1} parent=1 // pred_fallthru
      _
    %24 = sfence
    %s25 = smul.u32 0, 4
    %s26 = smul.u32 0, 52
    %s27 = sld [smem:[#allocation3 + %s26]]
    %s28 = sadd.s32 %s26, 1
    %s29 = sld [smem:[#allocation3 + %s28]]
    %s30 = sadd.s32 %s26, 2
    %s31 = sld [smem:[#allocation3 + %s30]]
    %s32 = sadd.s32 %s26, 3
    %s33 = sld [smem:[#allocation3 + %s32]]
    %s34 = sadd.s32 %s26, 4
    %s35 = sld [smem:[#allocation3 + %s34]]
    %s36 = sadd.s32 %s26, 5
    %s37 = sld [smem:[#allocation3 + %s36]]
    %s38 = sadd.s32 %s26, 6
    %s39 = sld [smem:[#allocation3 + %s38]]
    %s40 = sadd.s32 %s26, 7
    %s41 = sld [smem:[#allocation3 + %s40]]
    %s42 = sadd.s32 %s26, 8
    %s43 = sld [smem:[#allocation3 + %s42]]
    %s44 = sadd.s32 %s26, 9
    %s45 = sld [smem:[#allocation3 + %s44]]
    %s46 = sadd.s32 %s26, 10
    %s47 = sld [smem:[#allocation3 + %s46]]
    %s48 = sadd.s32 %s26, 11
    %s49 = sld [smem:[#allocation3 + %s48]]
    %s50 = sadd.s32 %s26, 12
    %s51 = sld [smem:[#allocation3 + %s50]]
    %v52 = vld [vmem:[%s1] sm:$0xff]
    %v53 = vld [vmem:[%s1 + $0x8] sm:$0xff]
    %v54 = vld [vmem:[%s1 + $0x10] sm:$0xff]
    %v55 = vld [vmem:[%s1 + $0x18] sm:$0xf]
    %v56 = vstv %s27
    %v57 = vmul.f32 %v52, %v56
    %v58 = vmul.f32 %v53, %v56
    %v59 = vmul.f32 %v54, %v56
    %v60 = vmul.f32 %v55, %v56
    %v61 = vstv %s29
    %v62 = vmul.f32 %v52, %v61
    %v63 = vmul.f32 %v53, %v61
    %v64 = vmul.f32 %v54, %v61
    %v65 = vmul.f32 %v55, %v61
    %v66 = vstv %s31
    %v67 = vmul.f32 %v52, %v66
    %v68 = vmul.f32 %v53, %v66
    %v69 = vmul.f32 %v54, %v66
    %v70 = vmul.f32 %v55, %v66
    %v71 = vstv %s33
    %v72 = vmul.f32 %v52, %v71
    %v73 = vmul.f32 %v53, %v71
    %v74 = vmul.f32 %v54, %v71
    %v75 = vmul.f32 %v55, %v71
    %v76 = vstv %s35
    %v77 = vmul.f32 %v52, %v76
    %v78 = vmul.f32 %v53, %v76
    %v79 = vmul.f32 %v54, %v76
    %v80 = vmul.f32 %v55, %v76
    %85 = vrot.lane.b32.xlu0 %v77, 124
    %v86 = vpop.permute.xlu0 %85
    %87 = vrot.lane.b32.xlu0 %v78, 124
    %v88 = vpop.permute.xlu0 %87
    %89 = vrot.lane.b32.xlu0 %v79, 124
    %v90 = vpop.permute.xlu0 %89
    %91 = vrot.lane.b32.xlu0 %v80, 124
    %v92 = vpop.permute.xlu0 %91
    %v97 = vadd.f32 %v57, %v86
    %v98 = vadd.f32 %v58, %v88
    %v99 = vadd.f32 %v59, %v90
    %v100 = vadd.f32 %v60, %v92
    %v101 = vstv %s37
    %v102 = vmul.f32 %v52, %v101
    %v103 = vmul.f32 %v53, %v101
    %v104 = vmul.f32 %v54, %v101
    %v105 = vmul.f32 %v55, %v101
    %110 = vrot.lane.b32.xlu0 %v102, 124
    %v111 = vpop.permute.xlu0 %110
    %112 = vrot.lane.b32.xlu0 %v103, 124
    %v113 = vpop.permute.xlu0 %112
    %114 = vrot.lane.b32.xlu0 %v104, 124
    %v115 = vpop.permute.xlu0 %114
    %116 = vrot.lane.b32.xlu0 %v105, 124
    %v117 = vpop.permute.xlu0 %116
    %v122 = vadd.f32 %v62, %v111
    %v123 = vadd.f32 %v63, %v113
    %v124 = vadd.f32 %v64, %v115
    %v125 = vadd.f32 %v65, %v117
    %v126 = vstv %s39
    %v127 = vmul.f32 %v52, %v126
    %v128 = vmul.f32 %v53, %v126
    %v129 = vmul.f32 %v54, %v126
    %v130 = vmul.f32 %v55, %v126
    %135 = vrot.lane.b32.xlu0 %v127, 124
    %v136 = vpop.permute.xlu0 %135
    %137 = vrot.lane.b32.xlu0 %v128, 124
    %v138 = vpop.permute.xlu0 %137
    %139 = vrot.lane.b32.xlu0 %v129, 124
    %v140 = vpop.permute.xlu0 %139
    %141 = vrot.lane.b32.xlu0 %v130, 124
    %v142 = vpop.permute.xlu0 %141
    %v147 = vadd.f32 %v67, %v136
    %v148 = vadd.f32 %v68, %v138
    %v149 = vadd.f32 %v69, %v140
    %v150 = vadd.f32 %v70, %v142
    %v151 = vstv %s41
    %v152 = vmul.f32 %v52, %v151
    %v153 = vmul.f32 %v53, %v151
    %v154 = vmul.f32 %v54, %v151
    %v155 = vmul.f32 %v55, %v151
    %160 = vrot.lane.b32.xlu0 %v152, 124
    %v161 = vpop.permute.xlu0 %160
    %162 = vrot.lane.b32.xlu0 %v153, 124
    %v163 = vpop.permute.xlu0 %162
    %164 = vrot.lane.b32.xlu0 %v154, 124
    %v165 = vpop.permute.xlu0 %164
    %166 = vrot.lane.b32.xlu0 %v155, 124
    %v167 = vpop.permute.xlu0 %166
    %v172 = vadd.f32 %v72, %v161
    %v173 = vadd.f32 %v73, %v163
    %v174 = vadd.f32 %v74, %v165
    %v175 = vadd.f32 %v75, %v167
    %v176 = vstv %s43
    %v177 = vmul.f32 %v52, %v176
    %v178 = vmul.f32 %v53, %v176
    %v179 = vmul.f32 %v54, %v176
    %v180 = vmul.f32 %v55, %v176
    %185 = vrot.lane.b32.xlu0 %v177, 120
    %v186 = vpop.permute.xlu0 %185
    %187 = vrot.lane.b32.xlu0 %v178, 120
    %v188 = vpop.permute.xlu0 %187
    %189 = vrot.lane.b32.xlu0 %v179, 120
    %v190 = vpop.permute.xlu0 %189
    %191 = vrot.lane.b32.xlu0 %v180, 120
    %v192 = vpop.permute.xlu0 %191
    %v197 = vadd.f32 %v97, %v186
    %v198 = vadd.f32 %v98, %v188
    %v199 = vadd.f32 %v99, %v190
    %v200 = vadd.f32 %v100, %v192
    %v201 = vstv %s45
    %v202 = vmul.f32 %v52, %v201
    %v203 = vmul.f32 %v53, %v201
    %v204 = vmul.f32 %v54, %v201
    %v205 = vmul.f32 %v55, %v201
    %210 = vrot.lane.b32.xlu0 %v202, 120
    %v211 = vpop.permute.xlu0 %210
    %212 = vrot.lane.b32.xlu0 %v203, 120
    %v213 = vpop.permute.xlu0 %212
    %214 = vrot.lane.b32.xlu0 %v204, 120
    %v215 = vpop.permute.xlu0 %214
    %216 = vrot.lane.b32.xlu0 %v205, 120
    %v217 = vpop.permute.xlu0 %216
    %v222 = vadd.f32 %v122, %v211
    %v223 = vadd.f32 %v123, %v213
    %v224 = vadd.f32 %v124, %v215
    %v225 = vadd.f32 %v125, %v217
    %v226 = vstv %s47
    %v227 = vmul.f32 %v52, %v226
    %v228 = vmul.f32 %v53, %v226
    %v229 = vmul.f32 %v54, %v226
    %v230 = vmul.f32 %v55, %v226
    %235 = vrot.lane.b32.xlu0 %v227, 120
    %v236 = vpop.permute.xlu0 %235
    %237 = vrot.lane.b32.xlu0 %v228, 120
    %v238 = vpop.permute.xlu0 %237
    %239 = vrot.lane.b32.xlu0 %v229, 120
    %v240 = vpop.permute.xlu0 %239
    %241 = vrot.lane.b32.xlu0 %v230, 120
    %v242 = vpop.permute.xlu0 %241
    %v247 = vadd.f32 %v147, %v236
    %v248 = vadd.f32 %v148, %v238
    %v249 = vadd.f32 %v149, %v240
    %v250 = vadd.f32 %v150, %v242
    %v251 = vstv %s49
    %v252 = vmul.f32 %v52, %v251
    %v253 = vmul.f32 %v53, %v251
    %v254 = vmul.f32 %v54, %v251
    %v255 = vmul.f32 %v55, %v251
    %260 = vrot.lane.b32.xlu0 %v252, 120
    %v261 = vpop.permute.xlu0 %260
    %262 = vrot.lane.b32.xlu0 %v253, 120
    %v263 = vpop.permute.xlu0 %262
    %264 = vrot.lane.b32.xlu0 %v254, 120
    %v265 = vpop.permute.xlu0 %264
    %266 = vrot.lane.b32.xlu0 %v255, 120
    %v267 = vpop.permute.xlu0 %266
    %v272 = vadd.f32 %v172, %v261
    %v273 = vadd.f32 %v173, %v263
    %v274 = vadd.f32 %v174, %v265
    %v275 = vadd.f32 %v175, %v267
    %v276 = vstv %s51
    %v277 = vmul.f32 %v52, %v276
    %v278 = vmul.f32 %v53, %v276
    %v279 = vmul.f32 %v54, %v276
    %v280 = vmul.f32 %v55, %v276
    %285 = vrot.lane.b32.xlu0 %v277, 116
    %v286 = vpop.permute.xlu0 %285
    %287 = vrot.lane.b32.xlu0 %v278, 116
    %v288 = vpop.permute.xlu0 %287
    %289 = vrot.lane.b32.xlu0 %v279, 116
    %v290 = vpop.permute.xlu0 %289
    %291 = vrot.lane.b32.xlu0 %v280, 116
    %v292 = vpop.permute.xlu0 %291
    %v297 = vadd.f32 %v197, %v286
    %v298 = vadd.f32 %v198, %v288
    %v299 = vadd.f32 %v199, %v290
    %v300 = vadd.f32 %v200, %v292
    %305 = vrot.lane.b32.xlu0 %v222, 127
    %v306 = vpop.permute.xlu0 %305
    %307 = vrot.lane.b32.xlu0 %v223, 127
    %v308 = vpop.permute.xlu0 %307
    %309 = vrot.lane.b32.xlu0 %v224, 127
    %v310 = vpop.permute.xlu0 %309
    %311 = vrot.lane.b32.xlu0 %v225, 127
    %v312 = vpop.permute.xlu0 %311
    %v317 = vadd.f32 %v297, %v306
    %v318 = vadd.f32 %v298, %v308
    %v319 = vadd.f32 %v299, %v310
    %v320 = vadd.f32 %v300, %v312
    %325 = vrot.lane.b32.xlu0 %v272, 127
    %v326 = vpop.permute.xlu0 %325
    %327 = vrot.lane.b32.xlu0 %v273, 127
    %v328 = vpop.permute.xlu0 %327
    %329 = vrot.lane.b32.xlu0 %v274, 127
    %v330 = vpop.permute.xlu0 %329
    %331 = vrot.lane.b32.xlu0 %v275, 127
    %v332 = vpop.permute.xlu0 %331
    %v337 = vadd.f32 %v247, %v326
    %v338 = vadd.f32 %v248, %v328
    %v339 = vadd.f32 %v249, %v330
    %v340 = vadd.f32 %v250, %v332
    %345 = vrot.lane.b32.xlu0 %v337, 126
    %v346 = vpop.permute.xlu0 %345
    %347 = vrot.lane.b32.xlu0 %v338, 126
    %v348 = vpop.permute.xlu0 %347
    %349 = vrot.lane.b32.xlu0 %v339, 126
    %v350 = vpop.permute.xlu0 %349
    %351 = vrot.lane.b32.xlu0 %v340, 126
    %v352 = vpop.permute.xlu0 %351
    %v357 = vadd.f32 %v317, %v346
    %v358 = vadd.f32 %v318, %v348
    %v359 = vadd.f32 %v319, %v350
    %v360 = vadd.f32 %v320, %v352
    %vm361 = vcmask 130048
    %362 = vst.msk [vmem:[#allocation2] sm:$0xff] %vm361, %v357
    %363 = vst.msk [vmem:[#allocation2 + $0x8] sm:$0xff] %vm361, %v358
    %364 = vst.msk [vmem:[#allocation2 + $0x10] sm:$0xff] %vm361, %v359
    %vm365 = vcmask 125952
    %366 = vst.msk [vmem:[#allocation2 + $0x18] sm:$0xf] %vm365, %v360
    %v367 = vld [vmem:[#allocation2] sm:$0xff]
    %v368 = vld [vmem:[#allocation2 + $0x8] sm:$0xff]
    %v369 = vmul.f32 %v367, %v56
    %v370 = vmul.f32 %v368, %v56
    %v371 = vld [vmem:[#allocation2 + $0x1] sm:$0xff]
    %v372 = vld [vmem:[#allocation2 + $0x9] sm:$0xff]
    %v373 = vmul.f32 %v371, %v61
    %v374 = vmul.f32 %v372, %v61
    %v375 = vld [vmem:[#allocation2 + $0x2] sm:$0xff]
    %v376 = vld [vmem:[#allocation2 + $0xa] sm:$0xff]
    %v377 = vmul.f32 %v375, %v66
    %v378 = vmul.f32 %v376, %v66
    %v379 = vld [vmem:[#allocation2 + $0x3] sm:$0xff]
    %v380 = vld [vmem:[#allocation2 + $0xb] sm:$0xff]
    %v381 = vmul.f32 %v379, %v71
    %v382 = vmul.f32 %v380, %v71
    %v383 = vld [vmem:[#allocation2 + $0x4] sm:$0xff]
    %v384 = vld [vmem:[#allocation2 + $0xc] sm:$0xff]
    %v385 = vmul.f32 %v383, %v76
    %v386 = vmul.f32 %v384, %v76
    %v387 = vadd.f32 %v369, %v385
    %v388 = vadd.f32 %v370, %v386
    %v389 = vld [vmem:[#allocation2 + $0x5] sm:$0xff]
    %v390 = vld [vmem:[#allocation2 + $0xd] sm:$0xff]
    %v391 = vmul.f32 %v389, %v101
    %v392 = vmul.f32 %v390, %v101
    %v393 = vadd.f32 %v373, %v391
    %v394 = vadd.f32 %v374, %v392
    %v395 = vld [vmem:[#allocation2 + $0x6] sm:$0xff]
    %v396 = vld [vmem:[#allocation2 + $0xe] sm:$0xff]
    %v397 = vmul.f32 %v395, %v126
    %v398 = vmul.f32 %v396, %v126
    %v399 = vadd.f32 %v377, %v397
    %v400 = vadd.f32 %v378, %v398
    %v401 = vld [vmem:[#allocation2 + $0x7] sm:$0xff]
    %v402 = vld [vmem:[#allocation2 + $0xf] sm:$0xff]
    %v403 = vmul.f32 %v401, %v151
    %v404 = vmul.f32 %v402, %v151
    %v405 = vadd.f32 %v381, %v403
    %v406 = vadd.f32 %v382, %v404
    %v407 = vld [vmem:[#allocation2 + $0x10] sm:$0xff]
    %v408 = vmul.f32 %v368, %v176
    %v409 = vmul.f32 %v407, %v176
    %v410 = vadd.f32 %v387, %v408
    %v411 = vadd.f32 %v388, %v409
    %v412 = vld [vmem:[#allocation2 + $0x11] sm:$0xff]
    %v413 = vmul.f32 %v372, %v201
    %v414 = vmul.f32 %v412, %v201
    %v415 = vadd.f32 %v393, %v413
    %v416 = vadd.f32 %v394, %v414
    %v417 = vld [vmem:[#allocation2 + $0x12] sm:$0xff]
    %v418 = vmul.f32 %v376, %v226
    %v419 = vmul.f32 %v417, %v226
    %v420 = vadd.f32 %v399, %v418
    %v421 = vadd.f32 %v400, %v419
    %v422 = vld [vmem:[#allocation2 + $0x13] sm:$0xff]
    %v423 = vmul.f32 %v380, %v251
    %v424 = vmul.f32 %v422, %v251
    %v425 = vadd.f32 %v405, %v423
    %v426 = vadd.f32 %v406, %v424
    %v427 = vld [vmem:[#allocation2 + $0x14] sm:$0xff]
    %v428 = vmul.f32 %v384, %v276
    %v429 = vmul.f32 %v427, %v276
    %v430 = vadd.f32 %v410, %v428
    %v431 = vadd.f32 %v411, %v429
    %v432 = vadd.f32 %v430, %v415
    %v433 = vadd.f32 %v431, %v416
    %v434 = vadd.f32 %v420, %v425
    %v435 = vadd.f32 %v421, %v426
    %v436 = vadd.f32 %v432, %v434
    %v437 = vadd.f32 %v433, %v435
    %438 = vst.msk [vmem:[#allocation6] sm:$0xff] %vm361, %v436
    %439 = vst.msk [vmem:[#allocation6 + $0x8] sm:$0xff] %vm361, %v437
    %s440 = sadd.s32 %s25, 1
    %s441 = smul.u32 %s440, 13
    %s442 = sld [smem:[#allocation3 + %s441]]
    %s443 = sadd.s32 %s441, 1
    %s444 = sld [smem:[#allocation3 + %s443]]
    %s445 = sadd.s32 %s441, 2
    %s446 = sld [smem:[#allocation3 + %s445]]
    %s447 = sadd.s32 %s441, 3
    %s448 = sld [smem:[#allocation3 + %s447]]
    %s449 = sadd.s32 %s441, 4
    %s450 = sld [smem:[#allocation3 + %s449]]
    %s451 = sadd.s32 %s441, 5
    %s452 = sld [smem:[#allocation3 + %s451]]
    %s453 = sadd.s32 %s441, 6
    %s454 = sld [smem:[#allocation3 + %s453]]
    %s455 = sadd.s32 %s441, 7
    %s456 = sld [smem:[#allocation3 + %s455]]
    %s457 = sadd.s32 %s441, 8
    %s458 = sld [smem:[#allocation3 + %s457]]
    %s459 = sadd.s32 %s441, 9
    %s460 = sld [smem:[#allocation3 + %s459]]
    %s461 = sadd.s32 %s441, 10
    %s462 = sld [smem:[#allocation3 + %s461]]
    %s463 = sadd.s32 %s441, 11
    %s464 = sld [smem:[#allocation3 + %s463]]
    %s465 = sadd.s32 %s441, 12
    %s466 = sld [smem:[#allocation3 + %s465]]
    %s467 = scalar_lea.vmem %s1, 32
    %v468 = vld [vmem:[%s467] sm:$0xff]
    %v469 = vld [vmem:[%s467 + $0x8] sm:$0xff]
    %v470 = vld [vmem:[%s467 + $0x10] sm:$0xff]
    %v471 = vld [vmem:[%s467 + $0x18] sm:$0xf]
    %v472 = vstv %s442
    %v473 = vmul.f32 %v468, %v472
    %v474 = vmul.f32 %v469, %v472
    %v475 = vmul.f32 %v470, %v472
    %v476 = vmul.f32 %v471, %v472
    %v477 = vstv %s444
    %v478 = vmul.f32 %v468, %v477
    %v479 = vmul.f32 %v469, %v477
    %v480 = vmul.f32 %v470, %v477
    %v481 = vmul.f32 %v471, %v477
    %v482 = vstv %s446
    %v483 = vmul.f32 %v468, %v482
    %v484 = vmul.f32 %v469, %v482
    %v485 = vmul.f32 %v470, %v482
    %v486 = vmul.f32 %v471, %v482
    %v487 = vstv %s448
    %v488 = vmul.f32 %v468, %v487
    %v489 = vmul.f32 %v469, %v487
    %v490 = vmul.f32 %v470, %v487
    %v491 = vmul.f32 %v471, %v487
    %v492 = vstv %s450
    %v493 = vmul.f32 %v468, %v492
    %v494 = vmul.f32 %v469, %v492
    %v495 = vmul.f32 %v470, %v492
    %v496 = vmul.f32 %v471, %v492
    %501 = vrot.lane.b32.xlu0 %v493, 124
    %v502 = vpop.permute.xlu0 %501
    %503 = vrot.lane.b32.xlu0 %v494, 124
    %v504 = vpop.permute.xlu0 %503
    %505 = vrot.lane.b32.xlu0 %v495, 124
    %v506 = vpop.permute.xlu0 %505
    %507 = vrot.lane.b32.xlu0 %v496, 124
    %v508 = vpop.permute.xlu0 %507
    %v513 = vadd.f32 %v473, %v502
    %v514 = vadd.f32 %v474, %v504
    %v515 = vadd.f32 %v475, %v506
    %v516 = vadd.f32 %v476, %v508
    %v517 = vstv %s452
    %v518 = vmul.f32 %v468, %v517
    %v519 = vmul.f32 %v469, %v517
    %v520 = vmul.f32 %v470, %v517
    %v521 = vmul.f32 %v471, %v517
    %526 = vrot.lane.b32.xlu0 %v518, 124
    %v527 = vpop.permute.xlu0 %526
    %528 = vrot.lane.b32.xlu0 %v519, 124
    %v529 = vpop.permute.xlu0 %528
    %530 = vrot.lane.b32.xlu0 %v520, 124
    %v531 = vpop.permute.xlu0 %530
    %532 = vrot.lane.b32.xlu0 %v521, 124
    %v533 = vpop.permute.xlu0 %532
    %v538 = vadd.f32 %v478, %v527
    %v539 = vadd.f32 %v479, %v529
    %v540 = vadd.f32 %v480, %v531
    %v541 = vadd.f32 %v481, %v533
    %v542 = vstv %s454
    %v543 = vmul.f32 %v468, %v542
    %v544 = vmul.f32 %v469, %v542
    %v545 = vmul.f32 %v470, %v542
    %v546 = vmul.f32 %v471, %v542
    %551 = vrot.lane.b32.xlu0 %v543, 124
    %v552 = vpop.permute.xlu0 %551
    %553 = vrot.lane.b32.xlu0 %v544, 124
    %v554 = vpop.permute.xlu0 %553
    %555 = vrot.lane.b32.xlu0 %v545, 124
    %v556 = vpop.permute.xlu0 %555
    %557 = vrot.lane.b32.xlu0 %v546, 124
    %v558 = vpop.permute.xlu0 %557
    %v563 = vadd.f32 %v483, %v552
    %v564 = vadd.f32 %v484, %v554
    %v565 = vadd.f32 %v485, %v556
    %v566 = vadd.f32 %v486, %v558
    %v567 = vstv %s456
    %v568 = vmul.f32 %v468, %v567
    %v569 = vmul.f32 %v469, %v567
    %v570 = vmul.f32 %v470, %v567
    %v571 = vmul.f32 %v471, %v567
    %576 = vrot.lane.b32.xlu0 %v568, 124
    %v577 = vpop.permute.xlu0 %576
    %578 = vrot.lane.b32.xlu0 %v569, 124
    %v579 = vpop.permute.xlu0 %578
    %580 = vrot.lane.b32.xlu0 %v570, 124
    %v581 = vpop.permute.xlu0 %580
    %582 = vrot.lane.b32.xlu0 %v571, 124
    %v583 = vpop.permute.xlu0 %582
    %v588 = vadd.f32 %v488, %v577
    %v589 = vadd.f32 %v489, %v579
    %v590 = vadd.f32 %v490, %v581
    %v591 = vadd.f32 %v491, %v583
    %v592 = vstv %s458
    %v593 = vmul.f32 %v468, %v592
    %v594 = vmul.f32 %v469, %v592
    %v595 = vmul.f32 %v470, %v592
    %v596 = vmul.f32 %v471, %v592
    %601 = vrot.lane.b32.xlu0 %v593, 120
    %v602 = vpop.permute.xlu0 %601
    %603 = vrot.lane.b32.xlu0 %v594, 120
    %v604 = vpop.permute.xlu0 %603
    %605 = vrot.lane.b32.xlu0 %v595, 120
    %v606 = vpop.permute.xlu0 %605
    %607 = vrot.lane.b32.xlu0 %v596, 120
    %v608 = vpop.permute.xlu0 %607
    %v613 = vadd.f32 %v513, %v602
    %v614 = vadd.f32 %v514, %v604
    %v615 = vadd.f32 %v515, %v606
    %v616 = vadd.f32 %v516, %v608
    %v617 = vstv %s460
    %v618 = vmul.f32 %v468, %v617
    %v619 = vmul.f32 %v469, %v617
    %v620 = vmul.f32 %v470, %v617
    %v621 = vmul.f32 %v471, %v617
    %626 = vrot.lane.b32.xlu0 %v618, 120
    %v627 = vpop.permute.xlu0 %626
    %628 = vrot.lane.b32.xlu0 %v619, 120
    %v629 = vpop.permute.xlu0 %628
    %630 = vrot.lane.b32.xlu0 %v620, 120
    %v631 = vpop.permute.xlu0 %630
    %632 = vrot.lane.b32.xlu0 %v621, 120
    %v633 = vpop.permute.xlu0 %632
    %v638 = vadd.f32 %v538, %v627
    %v639 = vadd.f32 %v539, %v629
    %v640 = vadd.f32 %v540, %v631
    %v641 = vadd.f32 %v541, %v633
    %v642 = vstv %s462
    %v643 = vmul.f32 %v468, %v642
    %v644 = vmul.f32 %v469, %v642
    %v645 = vmul.f32 %v470, %v642
    %v646 = vmul.f32 %v471, %v642
    %651 = vrot.lane.b32.xlu0 %v643, 120
    %v652 = vpop.permute.xlu0 %651
    %653 = vrot.lane.b32.xlu0 %v644, 120
    %v654 = vpop.permute.xlu0 %653
    %655 = vrot.lane.b32.xlu0 %v645, 120
    %v656 = vpop.permute.xlu0 %655
    %657 = vrot.lane.b32.xlu0 %v646, 120
    %v658 = vpop.permute.xlu0 %657
    %v663 = vadd.f32 %v563, %v652
    %v664 = vadd.f32 %v564, %v654
    %v665 = vadd.f32 %v565, %v656
    %v666 = vadd.f32 %v566, %v658
    %v667 = vstv %s464
    %v668 = vmul.f32 %v468, %v667
    %v669 = vmul.f32 %v469, %v667
    %v670 = vmul.f32 %v470, %v667
    %v671 = vmul.f32 %v471, %v667
    %676 = vrot.lane.b32.xlu0 %v668, 120
    %v677 = vpop.permute.xlu0 %676
    %678 = vrot.lane.b32.xlu0 %v669, 120
    %v679 = vpop.permute.xlu0 %678
    %680 = vrot.lane.b32.xlu0 %v670, 120
    %v681 = vpop.permute.xlu0 %680
    %682 = vrot.lane.b32.xlu0 %v671, 120
    %v683 = vpop.permute.xlu0 %682
    %v688 = vadd.f32 %v588, %v677
    %v689 = vadd.f32 %v589, %v679
    %v690 = vadd.f32 %v590, %v681
    %v691 = vadd.f32 %v591, %v683
    %v692 = vstv %s466
    %v693 = vmul.f32 %v468, %v692
    %v694 = vmul.f32 %v469, %v692
    %v695 = vmul.f32 %v470, %v692
    %v696 = vmul.f32 %v471, %v692
    %701 = vrot.lane.b32.xlu0 %v693, 116
    %v702 = vpop.permute.xlu0 %701
    %703 = vrot.lane.b32.xlu0 %v694, 116
    %v704 = vpop.permute.xlu0 %703
    %705 = vrot.lane.b32.xlu0 %v695, 116
    %v706 = vpop.permute.xlu0 %705
    %707 = vrot.lane.b32.xlu0 %v696, 116
    %v708 = vpop.permute.xlu0 %707
    %v713 = vadd.f32 %v613, %v702
    %v714 = vadd.f32 %v614, %v704
    %v715 = vadd.f32 %v615, %v706
    %v716 = vadd.f32 %v616, %v708
    %721 = vrot.lane.b32.xlu0 %v638, 127
    %v722 = vpop.permute.xlu0 %721
    %723 = vrot.lane.b32.xlu0 %v639, 127
    %v724 = vpop.permute.xlu0 %723
    %725 = vrot.lane.b32.xlu0 %v640, 127
    %v726 = vpop.permute.xlu0 %725
    %727 = vrot.lane.b32.xlu0 %v641, 127
    %v728 = vpop.permute.xlu0 %727
    %v733 = vadd.f32 %v713, %v722
    %v734 = vadd.f32 %v714, %v724
    %v735 = vadd.f32 %v715, %v726
    %v736 = vadd.f32 %v716, %v728
    %741 = vrot.lane.b32.xlu0 %v688, 127
    %v742 = vpop.permute.xlu0 %741
    %743 = vrot.lane.b32.xlu0 %v689, 127
    %v744 = vpop.permute.xlu0 %743
    %745 = vrot.lane.b32.xlu0 %v690, 127
    %v746 = vpop.permute.xlu0 %745
    %747 = vrot.lane.b32.xlu0 %v691, 127
    %v748 = vpop.permute.xlu0 %747
    %v753 = vadd.f32 %v663, %v742
    %v754 = vadd.f32 %v664, %v744
    %v755 = vadd.f32 %v665, %v746
    %v756 = vadd.f32 %v666, %v748
    %761 = vrot.lane.b32.xlu0 %v753, 126
    %v762 = vpop.permute.xlu0 %761
    %763 = vrot.lane.b32.xlu0 %v754, 126
    %v764 = vpop.permute.xlu0 %763
    %765 = vrot.lane.b32.xlu0 %v755, 126
    %v766 = vpop.permute.xlu0 %765
    %767 = vrot.lane.b32.xlu0 %v756, 126
    %v768 = vpop.permute.xlu0 %767
    %v773 = vadd.f32 %v733, %v762
    %v774 = vadd.f32 %v734, %v764
    %v775 = vadd.f32 %v735, %v766
    %v776 = vadd.f32 %v736, %v768
    %777 = vst.msk [vmem:[#allocation2] sm:$0xff] %vm361, %v773
    %778 = vst.msk [vmem:[#allocation2 + $0x8] sm:$0xff] %vm361, %v774
    %779 = vst.msk [vmem:[#allocation2 + $0x10] sm:$0xff] %vm361, %v775
    %780 = vst.msk [vmem:[#allocation2 + $0x18] sm:$0xf] %vm365, %v776
    %v781 = vld [vmem:[#allocation2] sm:$0xff]
    %v782 = vld [vmem:[#allocation2 + $0x8] sm:$0xff]
    %v783 = vmul.f32 %v781, %v472
    %v784 = vmul.f32 %v782, %v472
    %v785 = vld [vmem:[#allocation2 + $0x1] sm:$0xff]
    %v786 = vld [vmem:[#allocation2 + $0x9] sm:$0xff]
    %v787 = vmul.f32 %v785, %v477
    %v788 = vmul.f32 %v786, %v477
    %v789 = vld [vmem:[#allocation2 + $0x2] sm:$0xff]
    %v790 = vld [vmem:[#allocation2 + $0xa] sm:$0xff]
    %v791 = vmul.f32 %v789, %v482
    %v792 = vmul.f32 %v790, %v482
    %v793 = vld [vmem:[#allocation2 + $0x3] sm:$0xff]
    %v794 = vld [vmem:[#allocation2 + $0xb] sm:$0xff]
    %v795 = vmul.f32 %v793, %v487
    %v796 = vmul.f32 %v794, %v487
    %v797 = vld [vmem:[#allocation2 + $0x4] sm:$0xff]
    %v798 = vld [vmem:[#allocation2 + $0xc] sm:$0xff]
    %v799 = vmul.f32 %v797, %v492
    %v800 = vmul.f32 %v798, %v492
    %v801 = vadd.f32 %v783, %v799
    %v802 = vadd.f32 %v784, %v800
    %v803 = vld [vmem:[#allocation2 + $0x5] sm:$0xff]
    %v804 = vld [vmem:[#allocation2 + $0xd] sm:$0xff]
    %v805 = vmul.f32 %v803, %v517
    %v806 = vmul.f32 %v804, %v517
    %v807 = vadd.f32 %v787, %v805
    %v808 = vadd.f32 %v788, %v806
    %v809 = vld [vmem:[#allocation2 + $0x6] sm:$0xff]
    %v810 = vld [vmem:[#allocation2 + $0xe] sm:$0xff]
    %v811 = vmul.f32 %v809, %v542
    %v812 = vmul.f32 %v810, %v542
    %v813 = vadd.f32 %v791, %v811
    %v814 = vadd.f32 %v792, %v812
    %v815 = vld [vmem:[#allocation2 + $0x7] sm:$0xff]
    %v816 = vld [vmem:[#allocation2 + $0xf] sm:$0xff]
    %v817 = vmul.f32 %v815, %v567
    %v818 = vmul.f32 %v816, %v567
    %v819 = vadd.f32 %v795, %v817
    %v820 = vadd.f32 %v796, %v818
    %v821 = vld [vmem:[#allocation2 + $0x10] sm:$0xff]
    %v822 = vmul.f32 %v782, %v592
    %v823 = vmul.f32 %v821, %v592
    %v824 = vadd.f32 %v801, %v822
    %v825 = vadd.f32 %v802, %v823
    %v826 = vld [vmem:[#allocation2 + $0x11] sm:$0xff]
    %v827 = vmul.f32 %v786, %v617
    %v828 = vmul.f32 %v826, %v617
    %v829 = vadd.f32 %v807, %v827
    %v830 = vadd.f32 %v808, %v828
    %v831 = vld [vmem:[#allocation2 + $0x12] sm:$0xff]
    %v832 = vmul.f32 %v790, %v642
    %v833 = vmul.f32 %v831, %v642
    %v834 = vadd.f32 %v813, %v832
    %v835 = vadd.f32 %v814, %v833
    %v836 = vld [vmem:[#allocation2 + $0x13] sm:$0xff]
    %v837 = vmul.f32 %v794, %v667
    %v838 = vmul.f32 %v836, %v667
    %v839 = vadd.f32 %v819, %v837
    %v840 = vadd.f32 %v820, %v838
    %v841 = vld [vmem:[#allocation2 + $0x14] sm:$0xff]
    %v842 = vmul.f32 %v798, %v692
    %v843 = vmul.f32 %v841, %v692
    %v844 = vadd.f32 %v824, %v842
    %v845 = vadd.f32 %v825, %v843
    %v846 = vadd.f32 %v844, %v829
    %v847 = vadd.f32 %v845, %v830
    %v848 = vadd.f32 %v834, %v839
    %v849 = vadd.f32 %v835, %v840
    %v850 = vadd.f32 %v846, %v848
    %v851 = vadd.f32 %v847, %v849
    %s852 = scalar_lea.vmem [#allocation6], 16
    %853 = vst.msk [vmem:[%s852] sm:$0xff] %vm361, %v850
    %854 = vst.msk [vmem:[%s852 + $0x8] sm:$0xff] %vm361, %v851
    %s855 = sadd.s32 %s25, 2
    %s856 = smul.u32 %s855, 13
    %s857 = sld [smem:[#allocation3 + %s856]]
    %s858 = sadd.s32 %s856, 1
    %s859 = sld [smem:[#allocation3 + %s858]]
    %s860 = sadd.s32 %s856, 2
    %s861 = sld [smem:[#allocation3 + %s860]]
    %s862 = sadd.s32 %s856, 3
    %s863 = sld [smem:[#allocation3 + %s862]]
    %s864 = sadd.s32 %s856, 4
    %s865 = sld [smem:[#allocation3 + %s864]]
    %s866 = sadd.s32 %s856, 5
    %s867 = sld [smem:[#allocation3 + %s866]]
    %s868 = sadd.s32 %s856, 6
    %s869 = sld [smem:[#allocation3 + %s868]]
    %s870 = sadd.s32 %s856, 7
    %s871 = sld [smem:[#allocation3 + %s870]]
    %s872 = sadd.s32 %s856, 8
    %s873 = sld [smem:[#allocation3 + %s872]]
    %s874 = sadd.s32 %s856, 9
    %s875 = sld [smem:[#allocation3 + %s874]]
    %s876 = sadd.s32 %s856, 10
    %s877 = sld [smem:[#allocation3 + %s876]]
    %s878 = sadd.s32 %s856, 11
    %s879 = sld [smem:[#allocation3 + %s878]]
    %s880 = sadd.s32 %s856, 12
    %s881 = sld [smem:[#allocation3 + %s880]]
    %s882 = scalar_lea.vmem %s1, 64
    %v883 = vld [vmem:[%s882] sm:$0xff]
    %v884 = vld [vmem:[%s882 + $0x8] sm:$0xff]
    %v885 = vld [vmem:[%s882 + $0x10] sm:$0xff]
    %v886 = vld [vmem:[%s882 + $0x18] sm:$0xf]
    %v887 = vstv %s857
    %v888 = vmul.f32 %v883, %v887
    %v889 = vmul.f32 %v884, %v887
    %v890 = vmul.f32 %v885, %v887
    %v891 = vmul.f32 %v886, %v887
    %v892 = vstv %s859
    %v893 = vmul.f32 %v883, %v892
    %v894 = vmul.f32 %v884, %v892
    %v895 = vmul.f32 %v885, %v892
    %v896 = vmul.f32 %v886, %v892
    %v897 = vstv %s861
    %v898 = vmul.f32 %v883, %v897
    %v899 = vmul.f32 %v884, %v897
    %v900 = vmul.f32 %v885, %v897
    %v901 = vmul.f32 %v886, %v897
    %v902 = vstv %s863
    %v903 = vmul.f32 %v883, %v902
    %v904 = vmul.f32 %v884, %v902
    %v905 = vmul.f32 %v885, %v902
    %v906 = vmul.f32 %v886, %v902
    %v907 = vstv %s865
    %v908 = vmul.f32 %v883, %v907
    %v909 = vmul.f32 %v884, %v907
    %v910 = vmul.f32 %v885, %v907
    %v911 = vmul.f32 %v886, %v907
    %916 = vrot.lane.b32.xlu0 %v908, 124
    %v917 = vpop.permute.xlu0 %916
    %918 = vrot.lane.b32.xlu0 %v909, 124
    %v919 = vpop.permute.xlu0 %918
    %920 = vrot.lane.b32.xlu0 %v910, 124
    %v921 = vpop.permute.xlu0 %920
    %922 = vrot.lane.b32.xlu0 %v911, 124
    %v923 = vpop.permute.xlu0 %922
    %v928 = vadd.f32 %v888, %v917
    %v929 = vadd.f32 %v889, %v919
    %v930 = vadd.f32 %v890, %v921
    %v931 = vadd.f32 %v891, %v923
    %v932 = vstv %s867
    %v933 = vmul.f32 %v883, %v932
    %v934 = vmul.f32 %v884, %v932
    %v935 = vmul.f32 %v885, %v932
    %v936 = vmul.f32 %v886, %v932
    %941 = vrot.lane.b32.xlu0 %v933, 124
    %v942 = vpop.permute.xlu0 %941
    %943 = vrot.lane.b32.xlu0 %v934, 124
    %v944 = vpop.permute.xlu0 %943
    %945 = vrot.lane.b32.xlu0 %v935, 124
    %v946 = vpop.permute.xlu0 %945
    %947 = vrot.lane.b32.xlu0 %v936, 124
    %v948 = vpop.permute.xlu0 %947
    %v953 = vadd.f32 %v893, %v942
    %v954 = vadd.f32 %v894, %v944
    %v955 = vadd.f32 %v895, %v946
    %v956 = vadd.f32 %v896, %v948
    %v957 = vstv %s869
    %v958 = vmul.f32 %v883, %v957
    %v959 = vmul.f32 %v884, %v957
    %v960 = vmul.f32 %v885, %v957
    %v961 = vmul.f32 %v886, %v957
    %966 = vrot.lane.b32.xlu0 %v958, 124
    %v967 = vpop.permute.xlu0 %966
    %968 = vrot.lane.b32.xlu0 %v959, 124
    %v969 = vpop.permute.xlu0 %968
    %970 = vrot.lane.b32.xlu0 %v960, 124
    %v971 = vpop.permute.xlu0 %970
    %972 = vrot.lane.b32.xlu0 %v961, 124
    %v973 = vpop.permute.xlu0 %972
    %v978 = vadd.f32 %v898, %v967
    %v979 = vadd.f32 %v899, %v969
    %v980 = vadd.f32 %v900, %v971
    %v981 = vadd.f32 %v901, %v973
    %v982 = vstv %s871
    %v983 = vmul.f32 %v883, %v982
    %v984 = vmul.f32 %v884, %v982
    %v985 = vmul.f32 %v885, %v982
    %v986 = vmul.f32 %v886, %v982
    %991 = vrot.lane.b32.xlu0 %v983, 124
    %v992 = vpop.permute.xlu0 %991
    %993 = vrot.lane.b32.xlu0 %v984, 124
    %v994 = vpop.permute.xlu0 %993
    %995 = vrot.lane.b32.xlu0 %v985, 124
    %v996 = vpop.permute.xlu0 %995
    %997 = vrot.lane.b32.xlu0 %v986, 124
    %v998 = vpop.permute.xlu0 %997
    %v1003 = vadd.f32 %v903, %v992
    %v1004 = vadd.f32 %v904, %v994
    %v1005 = vadd.f32 %v905, %v996
    %v1006 = vadd.f32 %v906, %v998
    %v1007 = vstv %s873
    %v1008 = vmul.f32 %v883, %v1007
    %v1009 = vmul.f32 %v884, %v1007
    %v1010 = vmul.f32 %v885, %v1007
    %v1011 = vmul.f32 %v886, %v1007
    %1016 = vrot.lane.b32.xlu0 %v1008, 120
    %v1017 = vpop.permute.xlu0 %1016
    %1018 = vrot.lane.b32.xlu0 %v1009, 120
    %v1019 = vpop.permute.xlu0 %1018
    %1020 = vrot.lane.b32.xlu0 %v1010, 120
    %v1021 = vpop.permute.xlu0 %1020
    %1022 = vrot.lane.b32.xlu0 %v1011, 120
    %v1023 = vpop.permute.xlu0 %1022
    %v1028 = vadd.f32 %v928, %v1017
    %v1029 = vadd.f32 %v929, %v1019
    %v1030 = vadd.f32 %v930, %v1021
    %v1031 = vadd.f32 %v931, %v1023
    %v1032 = vstv %s875
    %v1033 = vmul.f32 %v883, %v1032
    %v1034 = vmul.f32 %v884, %v1032
    %v1035 = vmul.f32 %v885, %v1032
    %v1036 = vmul.f32 %v886, %v1032
    %1041 = vrot.lane.b32.xlu0 %v1033, 120
    %v1042 = vpop.permute.xlu0 %1041
    %1043 = vrot.lane.b32.xlu0 %v1034, 120
    %v1044 = vpop.permute.xlu0 %1043
    %1045 = vrot.lane.b32.xlu0 %v1035, 120
    %v1046 = vpop.permute.xlu0 %1045
    %1047 = vrot.lane.b32.xlu0 %v1036, 120
    %v1048 = vpop.permute.xlu0 %1047
    %v1053 = vadd.f32 %v953, %v1042
    %v1054 = vadd.f32 %v954, %v1044
    %v1055 = vadd.f32 %v955, %v1046
    %v1056 = vadd.f32 %v956, %v1048
    %v1057 = vstv %s877
    %v1058 = vmul.f32 %v883, %v1057
    %v1059 = vmul.f32 %v884, %v1057
    %v1060 = vmul.f32 %v885, %v1057
    %v1061 = vmul.f32 %v886, %v1057
    %1066 = vrot.lane.b32.xlu0 %v1058, 120
    %v1067 = vpop.permute.xlu0 %1066
    %1068 = vrot.lane.b32.xlu0 %v1059, 120
    %v1069 = vpop.permute.xlu0 %1068
    %1070 = vrot.lane.b32.xlu0 %v1060, 120
    %v1071 = vpop.permute.xlu0 %1070
    %1072 = vrot.lane.b32.xlu0 %v1061, 120
    %v1073 = vpop.permute.xlu0 %1072
    %v1078 = vadd.f32 %v978, %v1067
    %v1079 = vadd.f32 %v979, %v1069
    %v1080 = vadd.f32 %v980, %v1071
    %v1081 = vadd.f32 %v981, %v1073
    %v1082 = vstv %s879
    %v1083 = vmul.f32 %v883, %v1082
    %v1084 = vmul.f32 %v884, %v1082
    %v1085 = vmul.f32 %v885, %v1082
    %v1086 = vmul.f32 %v886, %v1082
    %1091 = vrot.lane.b32.xlu0 %v1083, 120
    %v1092 = vpop.permute.xlu0 %1091
    %1093 = vrot.lane.b32.xlu0 %v1084, 120
    %v1094 = vpop.permute.xlu0 %1093
    %1095 = vrot.lane.b32.xlu0 %v1085, 120
    %v1096 = vpop.permute.xlu0 %1095
    %1097 = vrot.lane.b32.xlu0 %v1086, 120
    %v1098 = vpop.permute.xlu0 %1097
    %v1103 = vadd.f32 %v1003, %v1092
    %v1104 = vadd.f32 %v1004, %v1094
    %v1105 = vadd.f32 %v1005, %v1096
    %v1106 = vadd.f32 %v1006, %v1098
    %v1107 = vstv %s881
    %v1108 = vmul.f32 %v883, %v1107
    %v1109 = vmul.f32 %v884, %v1107
    %v1110 = vmul.f32 %v885, %v1107
    %v1111 = vmul.f32 %v886, %v1107
    %1116 = vrot.lane.b32.xlu0 %v1108, 116
    %v1117 = vpop.permute.xlu0 %1116
    %1118 = vrot.lane.b32.xlu0 %v1109, 116
    %v1119 = vpop.permute.xlu0 %1118
    %1120 = vrot.lane.b32.xlu0 %v1110, 116
    %v1121 = vpop.permute.xlu0 %1120
    %1122 = vrot.lane.b32.xlu0 %v1111, 116
    %v1123 = vpop.permute.xlu0 %1122
    %v1128 = vadd.f32 %v1028, %v1117
    %v1129 = vadd.f32 %v1029, %v1119
    %v1130 = vadd.f32 %v1030, %v1121
    %v1131 = vadd.f32 %v1031, %v1123
    %1136 = vrot.lane.b32.xlu0 %v1053, 127
    %v1137 = vpop.permute.xlu0 %1136
    %1138 = vrot.lane.b32.xlu0 %v1054, 127
    %v1139 = vpop.permute.xlu0 %1138
    %1140 = vrot.lane.b32.xlu0 %v1055, 127
    %v1141 = vpop.permute.xlu0 %1140
    %1142 = vrot.lane.b32.xlu0 %v1056, 127
    %v1143 = vpop.permute.xlu0 %1142
    %v1148 = vadd.f32 %v1128, %v1137
    %v1149 = vadd.f32 %v1129, %v1139
    %v1150 = vadd.f32 %v1130, %v1141
    %v1151 = vadd.f32 %v1131, %v1143
    %1156 = vrot.lane.b32.xlu0 %v1103, 127
    %v1157 = vpop.permute.xlu0 %1156
    %1158 = vrot.lane.b32.xlu0 %v1104, 127
    %v1159 = vpop.permute.xlu0 %1158
    %1160 = vrot.lane.b32.xlu0 %v1105, 127
    %v1161 = vpop.permute.xlu0 %1160
    %1162 = vrot.lane.b32.xlu0 %v1106, 127
    %v1163 = vpop.permute.xlu0 %1162
    %v1168 = vadd.f32 %v1078, %v1157
    %v1169 = vadd.f32 %v1079, %v1159
    %v1170 = vadd.f32 %v1080, %v1161
    %v1171 = vadd.f32 %v1081, %v1163
    %1176 = vrot.lane.b32.xlu0 %v1168, 126
    %v1177 = vpop.permute.xlu0 %1176
    %1178 = vrot.lane.b32.xlu0 %v1169, 126
    %v1179 = vpop.permute.xlu0 %1178
    %1180 = vrot.lane.b32.xlu0 %v1170, 126
    %v1181 = vpop.permute.xlu0 %1180
    %1182 = vrot.lane.b32.xlu0 %v1171, 126
    %v1183 = vpop.permute.xlu0 %1182
    %v1188 = vadd.f32 %v1148, %v1177
    %v1189 = vadd.f32 %v1149, %v1179
    %v1190 = vadd.f32 %v1150, %v1181
    %v1191 = vadd.f32 %v1151, %v1183
    %1192 = vst.msk [vmem:[#allocation2] sm:$0xff] %vm361, %v1188
    %1193 = vst.msk [vmem:[#allocation2 + $0x8] sm:$0xff] %vm361, %v1189
    %1194 = vst.msk [vmem:[#allocation2 + $0x10] sm:$0xff] %vm361, %v1190
    %1195 = vst.msk [vmem:[#allocation2 + $0x18] sm:$0xf] %vm365, %v1191
    %v1196 = vld [vmem:[#allocation2] sm:$0xff]
    %v1197 = vld [vmem:[#allocation2 + $0x8] sm:$0xff]
    %v1198 = vmul.f32 %v1196, %v887
    %v1199 = vmul.f32 %v1197, %v887
    %v1200 = vld [vmem:[#allocation2 + $0x1] sm:$0xff]
    %v1201 = vld [vmem:[#allocation2 + $0x9] sm:$0xff]
    %v1202 = vmul.f32 %v1200, %v892
    %v1203 = vmul.f32 %v1201, %v892
    %v1204 = vld [vmem:[#allocation2 + $0x2] sm:$0xff]
    %v1205 = vld [vmem:[#allocation2 + $0xa] sm:$0xff]
    %v1206 = vmul.f32 %v1204, %v897
    %v1207 = vmul.f32 %v1205, %v897
    %v1208 = vld [vmem:[#allocation2 + $0x3] sm:$0xff]
    %v1209 = vld [vmem:[#allocation2 + $0xb] sm:$0xff]
    %v1210 = vmul.f32 %v1208, %v902
    %v1211 = vmul.f32 %v1209, %v902
    %v1212 = vld [vmem:[#allocation2 + $0x4] sm:$0xff]
    %v1213 = vld [vmem:[#allocation2 + $0xc] sm:$0xff]
    %v1214 = vmul.f32 %v1212, %v907
    %v1215 = vmul.f32 %v1213, %v907
    %v1216 = vadd.f32 %v1198, %v1214
    %v1217 = vadd.f32 %v1199, %v1215
    %v1218 = vld [vmem:[#allocation2 + $0x5] sm:$0xff]
    %v1219 = vld [vmem:[#allocation2 + $0xd] sm:$0xff]
    %v1220 = vmul.f32 %v1218, %v932
    %v1221 = vmul.f32 %v1219, %v932
    %v1222 = vadd.f32 %v1202, %v1220
    %v1223 = vadd.f32 %v1203, %v1221
    %v1224 = vld [vmem:[#allocation2 + $0x6] sm:$0xff]
    %v1225 = vld [vmem:[#allocation2 + $0xe] sm:$0xff]
    %v1226 = vmul.f32 %v1224, %v957
    %v1227 = vmul.f32 %v1225, %v957
    %v1228 = vadd.f32 %v1206, %v1226
    %v1229 = vadd.f32 %v1207, %v1227
    %v1230 = vld [vmem:[#allocation2 + $0x7] sm:$0xff]
    %v1231 = vld [vmem:[#allocation2 + $0xf] sm:$0xff]
    %v1232 = vmul.f32 %v1230, %v982
    %v1233 = vmul.f32 %v1231, %v982
    %v1234 = vadd.f32 %v1210, %v1232
    %v1235 = vadd.f32 %v1211, %v1233
    %v1236 = vld [vmem:[#allocation2 + $0x10] sm:$0xff]
    %v1237 = vmul.f32 %v1197, %v1007
    %v1238 = vmul.f32 %v1236, %v1007
    %v1239 = vadd.f32 %v1216, %v1237
    %v1240 = vadd.f32 %v1217, %v1238
    %v1241 = vld [vmem:[#allocation2 + $0x11] sm:$0xff]
    %v1242 = vmul.f32 %v1201, %v1032
    %v1243 = vmul.f32 %v1241, %v1032
    %v1244 = vadd.f32 %v1222, %v1242
    %v1245 = vadd.f32 %v1223, %v1243
    %v1246 = vld [vmem:[#allocation2 + $0x12] sm:$0xff]
    %v1247 = vmul.f32 %v1205, %v1057
    %v1248 = vmul.f32 %v1246, %v1057
    %v1249 = vadd.f32 %v1228, %v1247
    %v1250 = vadd.f32 %v1229, %v1248
    %v1251 = vld [vmem:[#allocation2 + $0x13] sm:$0xff]
    %v1252 = vmul.f32 %v1209, %v1082
    %v1253 = vmul.f32 %v1251, %v1082
    %v1254 = vadd.f32 %v1234, %v1252
    %v1255 = vadd.f32 %v1235, %v1253
    %v1256 = vld [vmem:[#allocation2 + $0x14] sm:$0xff]
    %v1257 = vmul.f32 %v1213, %v1107
    %v1258 = vmul.f32 %v1256, %v1107
    %v1259 = vadd.f32 %v1239, %v1257
    %v1260 = vadd.f32 %v1240, %v1258
    %v1261 = vadd.f32 %v1259, %v1244
    %v1262 = vadd.f32 %v1260, %v1245
    %v1263 = vadd.f32 %v1249, %v1254
    %v1264 = vadd.f32 %v1250, %v1255
    %v1265 = vadd.f32 %v1261, %v1263
    %v1266 = vadd.f32 %v1262, %v1264
    %s1267 = scalar_lea.vmem [#allocation6], 32
    %1268 = vst.msk [vmem:[%s1267] sm:$0xff] %vm361, %v1265
    %1269 = vst.msk [vmem:[%s1267 + $0x8] sm:$0xff] %vm361, %v1266
    %s1270 = sadd.s32 %s25, 3
    %s1271 = smul.u32 %s1270, 13
    %s1272 = sld [smem:[#allocation3 + %s1271]]
    %s1273 = sadd.s32 %s1271, 1
    %s1274 = sld [smem:[#allocation3 + %s1273]]
    %s1275 = sadd.s32 %s1271, 2
    %s1276 = sld [smem:[#allocation3 + %s1275]]
    %s1277 = sadd.s32 %s1271, 3
    %s1278 = sld [smem:[#allocation3 + %s1277]]
    %s1279 = sadd.s32 %s1271, 4
    %s1280 = sld [smem:[#allocation3 + %s1279]]
    %s1281 = sadd.s32 %s1271, 5
    %s1282 = sld [smem:[#allocation3 + %s1281]]
    %s1283 = sadd.s32 %s1271, 6
    %s1284 = sld [smem:[#allocation3 + %s1283]]
    %s1285 = sadd.s32 %s1271, 7
    %s1286 = sld [smem:[#allocation3 + %s1285]]
    %s1287 = sadd.s32 %s1271, 8
    %s1288 = sld [smem:[#allocation3 + %s1287]]
    %s1289 = sadd.s32 %s1271, 9
    %s1290 = sld [smem:[#allocation3 + %s1289]]
    %s1291 = sadd.s32 %s1271, 10
    %s1292 = sld [smem:[#allocation3 + %s1291]]
    %s1293 = sadd.s32 %s1271, 11
    %s1294 = sld [smem:[#allocation3 + %s1293]]
    %s1295 = sadd.s32 %s1271, 12
    %s1296 = sld [smem:[#allocation3 + %s1295]]
    %s1297 = scalar_lea.vmem %s1, 96
    %v1298 = vld [vmem:[%s1297] sm:$0xff]
    %v1299 = vld [vmem:[%s1297 + $0x8] sm:$0xff]
    %v1300 = vld [vmem:[%s1297 + $0x10] sm:$0xff]
    %v1301 = vld [vmem:[%s1297 + $0x18] sm:$0xf]
    %v1302 = vstv %s1272
    %v1303 = vmul.f32 %v1298, %v1302
    %v1304 = vmul.f32 %v1299, %v1302
    %v1305 = vmul.f32 %v1300, %v1302
    %v1306 = vmul.f32 %v1301, %v1302
    %v1307 = vstv %s1274
    %v1308 = vmul.f32 %v1298, %v1307
    %v1309 = vmul.f32 %v1299, %v1307
    %v1310 = vmul.f32 %v1300, %v1307
    %v1311 = vmul.f32 %v1301, %v1307
    %v1312 = vstv %s1276
    %v1313 = vmul.f32 %v1298, %v1312
    %v1314 = vmul.f32 %v1299, %v1312
    %v1315 = vmul.f32 %v1300, %v1312
    %v1316 = vmul.f32 %v1301, %v1312
    %v1317 = vstv %s1278
    %v1318 = vmul.f32 %v1298, %v1317
    %v1319 = vmul.f32 %v1299, %v1317
    %v1320 = vmul.f32 %v1300, %v1317
    %v1321 = vmul.f32 %v1301, %v1317
    %v1322 = vstv %s1280
    %v1323 = vmul.f32 %v1298, %v1322
    %v1324 = vmul.f32 %v1299, %v1322
    %v1325 = vmul.f32 %v1300, %v1322
    %v1326 = vmul.f32 %v1301, %v1322
    %1331 = vrot.lane.b32.xlu0 %v1323, 124
    %v1332 = vpop.permute.xlu0 %1331
    %1333 = vrot.lane.b32.xlu0 %v1324, 124
    %v1334 = vpop.permute.xlu0 %1333
    %1335 = vrot.lane.b32.xlu0 %v1325, 124
    %v1336 = vpop.permute.xlu0 %1335
    %1337 = vrot.lane.b32.xlu0 %v1326, 124
    %v1338 = vpop.permute.xlu0 %1337
    %v1343 = vadd.f32 %v1303, %v1332
    %v1344 = vadd.f32 %v1304, %v1334
    %v1345 = vadd.f32 %v1305, %v1336
    %v1346 = vadd.f32 %v1306, %v1338
    %v1347 = vstv %s1282
    %v1348 = vmul.f32 %v1298, %v1347
    %v1349 = vmul.f32 %v1299, %v1347
    %v1350 = vmul.f32 %v1300, %v1347
    %v1351 = vmul.f32 %v1301, %v1347
    %1356 = vrot.lane.b32.xlu0 %v1348, 124
    %v1357 = vpop.permute.xlu0 %1356
    %1358 = vrot.lane.b32.xlu0 %v1349, 124
    %v1359 = vpop.permute.xlu0 %1358
    %1360 = vrot.lane.b32.xlu0 %v1350, 124
    %v1361 = vpop.permute.xlu0 %1360
    %1362 = vrot.lane.b32.xlu0 %v1351, 124
    %v1363 = vpop.permute.xlu0 %1362
    %v1368 = vadd.f32 %v1308, %v1357
    %v1369 = vadd.f32 %v1309, %v1359
    %v1370 = vadd.f32 %v1310, %v1361
    %v1371 = vadd.f32 %v1311, %v1363
    %v1372 = vstv %s1284
    %v1373 = vmul.f32 %v1298, %v1372
    %v1374 = vmul.f32 %v1299, %v1372
    %v1375 = vmul.f32 %v1300, %v1372
    %v1376 = vmul.f32 %v1301, %v1372
    %1381 = vrot.lane.b32.xlu0 %v1373, 124
    %v1382 = vpop.permute.xlu0 %1381
    %1383 = vrot.lane.b32.xlu0 %v1374, 124
    %v1384 = vpop.permute.xlu0 %1383
    %1385 = vrot.lane.b32.xlu0 %v1375, 124
    %v1386 = vpop.permute.xlu0 %1385
    %1387 = vrot.lane.b32.xlu0 %v1376, 124
    %v1388 = vpop.permute.xlu0 %1387
    %v1393 = vadd.f32 %v1313, %v1382
    %v1394 = vadd.f32 %v1314, %v1384
    %v1395 = vadd.f32 %v1315, %v1386
    %v1396 = vadd.f32 %v1316, %v1388
    %v1397 = vstv %s1286
    %v1398 = vmul.f32 %v1298, %v1397
    %v1399 = vmul.f32 %v1299, %v1397
    %v1400 = vmul.f32 %v1300, %v1397
    %v1401 = vmul.f32 %v1301, %v1397
    %1406 = vrot.lane.b32.xlu0 %v1398, 124
    %v1407 = vpop.permute.xlu0 %1406
    %1408 = vrot.lane.b32.xlu0 %v1399, 124
    %v1409 = vpop.permute.xlu0 %1408
    %1410 = vrot.lane.b32.xlu0 %v1400, 124
    %v1411 = vpop.permute.xlu0 %1410
    %1412 = vrot.lane.b32.xlu0 %v1401, 124
    %v1413 = vpop.permute.xlu0 %1412
    %v1418 = vadd.f32 %v1318, %v1407
    %v1419 = vadd.f32 %v1319, %v1409
    %v1420 = vadd.f32 %v1320, %v1411
    %v1421 = vadd.f32 %v1321, %v1413
    %v1422 = vstv %s1288
    %v1423 = vmul.f32 %v1298, %v1422
    %v1424 = vmul.f32 %v1299, %v1422
    %v1425 = vmul.f32 %v1300, %v1422
    %v1426 = vmul.f32 %v1301, %v1422
    %1431 = vrot.lane.b32.xlu0 %v1423, 120
    %v1432 = vpop.permute.xlu0 %1431
    %1433 = vrot.lane.b32.xlu0 %v1424, 120
    %v1434 = vpop.permute.xlu0 %1433
    %1435 = vrot.lane.b32.xlu0 %v1425, 120
    %v1436 = vpop.permute.xlu0 %1435
    %1437 = vrot.lane.b32.xlu0 %v1426, 120
    %v1438 = vpop.permute.xlu0 %1437
    %v1443 = vadd.f32 %v1343, %v1432
    %v1444 = vadd.f32 %v1344, %v1434
    %v1445 = vadd.f32 %v1345, %v1436
    %v1446 = vadd.f32 %v1346, %v1438
    %v1447 = vstv %s1290
    %v1448 = vmul.f32 %v1298, %v1447
    %v1449 = vmul.f32 %v1299, %v1447
    %v1450 = vmul.f32 %v1300, %v1447
    %v1451 = vmul.f32 %v1301, %v1447
    %1456 = vrot.lane.b32.xlu0 %v1448, 120
    %v1457 = vpop.permute.xlu0 %1456
    %1458 = vrot.lane.b32.xlu0 %v1449, 120
    %v1459 = vpop.permute.xlu0 %1458
    %1460 = vrot.lane.b32.xlu0 %v1450, 120
    %v1461 = vpop.permute.xlu0 %1460
    %1462 = vrot.lane.b32.xlu0 %v1451, 120
    %v1463 = vpop.permute.xlu0 %1462
    %v1468 = vadd.f32 %v1368, %v1457
    %v1469 = vadd.f32 %v1369, %v1459
    %v1470 = vadd.f32 %v1370, %v1461
    %v1471 = vadd.f32 %v1371, %v1463
    %v1472 = vstv %s1292
    %v1473 = vmul.f32 %v1298, %v1472
    %v1474 = vmul.f32 %v1299, %v1472
    %v1475 = vmul.f32 %v1300, %v1472
    %v1476 = vmul.f32 %v1301, %v1472
    %1481 = vrot.lane.b32.xlu0 %v1473, 120
    %v1482 = vpop.permute.xlu0 %1481
    %1483 = vrot.lane.b32.xlu0 %v1474, 120
    %v1484 = vpop.permute.xlu0 %1483
    %1485 = vrot.lane.b32.xlu0 %v1475, 120
    %v1486 = vpop.permute.xlu0 %1485
    %1487 = vrot.lane.b32.xlu0 %v1476, 120
    %v1488 = vpop.permute.xlu0 %1487
    %v1493 = vadd.f32 %v1393, %v1482
    %v1494 = vadd.f32 %v1394, %v1484
    %v1495 = vadd.f32 %v1395, %v1486
    %v1496 = vadd.f32 %v1396, %v1488
    %v1497 = vstv %s1294
    %v1498 = vmul.f32 %v1298, %v1497
    %v1499 = vmul.f32 %v1299, %v1497
    %v1500 = vmul.f32 %v1300, %v1497
    %v1501 = vmul.f32 %v1301, %v1497
    %1506 = vrot.lane.b32.xlu0 %v1498, 120
    %v1507 = vpop.permute.xlu0 %1506
    %1508 = vrot.lane.b32.xlu0 %v1499, 120
    %v1509 = vpop.permute.xlu0 %1508
    %1510 = vrot.lane.b32.xlu0 %v1500, 120
    %v1511 = vpop.permute.xlu0 %1510
    %1512 = vrot.lane.b32.xlu0 %v1501, 120
    %v1513 = vpop.permute.xlu0 %1512
    %v1518 = vadd.f32 %v1418, %v1507
    %v1519 = vadd.f32 %v1419, %v1509
    %v1520 = vadd.f32 %v1420, %v1511
    %v1521 = vadd.f32 %v1421, %v1513
    %v1522 = vstv %s1296
    %v1523 = vmul.f32 %v1298, %v1522
    %v1524 = vmul.f32 %v1299, %v1522
    %v1525 = vmul.f32 %v1300, %v1522
    %v1526 = vmul.f32 %v1301, %v1522
    %1531 = vrot.lane.b32.xlu0 %v1523, 116
    %v1532 = vpop.permute.xlu0 %1531
    %1533 = vrot.lane.b32.xlu0 %v1524, 116
    %v1534 = vpop.permute.xlu0 %1533
    %1535 = vrot.lane.b32.xlu0 %v1525, 116
    %v1536 = vpop.permute.xlu0 %1535
    %1537 = vrot.lane.b32.xlu0 %v1526, 116
    %v1538 = vpop.permute.xlu0 %1537
    %v1543 = vadd.f32 %v1443, %v1532
    %v1544 = vadd.f32 %v1444, %v1534
    %v1545 = vadd.f32 %v1445, %v1536
    %v1546 = vadd.f32 %v1446, %v1538
    %1551 = vrot.lane.b32.xlu0 %v1468, 127
    %v1552 = vpop.permute.xlu0 %1551
    %1553 = vrot.lane.b32.xlu0 %v1469, 127
    %v1554 = vpop.permute.xlu0 %1553
    %1555 = vrot.lane.b32.xlu0 %v1470, 127
    %v1556 = vpop.permute.xlu0 %1555
    %1557 = vrot.lane.b32.xlu0 %v1471, 127
    %v1558 = vpop.permute.xlu0 %1557
    %v1563 = vadd.f32 %v1543, %v1552
    %v1564 = vadd.f32 %v1544, %v1554
    %v1565 = vadd.f32 %v1545, %v1556
    %v1566 = vadd.f32 %v1546, %v1558
    %1571 = vrot.lane.b32.xlu0 %v1518, 127
    %v1572 = vpop.permute.xlu0 %1571
    %1573 = vrot.lane.b32.xlu0 %v1519, 127
    %v1574 = vpop.permute.xlu0 %1573
    %1575 = vrot.lane.b32.xlu0 %v1520, 127
    %v1576 = vpop.permute.xlu0 %1575
    %1577 = vrot.lane.b32.xlu0 %v1521, 127
    %v1578 = vpop.permute.xlu0 %1577
    %v1583 = vadd.f32 %v1493, %v1572
    %v1584 = vadd.f32 %v1494, %v1574
    %v1585 = vadd.f32 %v1495, %v1576
    %v1586 = vadd.f32 %v1496, %v1578
    %1591 = vrot.lane.b32.xlu0 %v1583, 126
    %v1592 = vpop.permute.xlu0 %1591
    %1593 = vrot.lane.b32.xlu0 %v1584, 126
    %v1594 = vpop.permute.xlu0 %1593
    %1595 = vrot.lane.b32.xlu0 %v1585, 126
    %v1596 = vpop.permute.xlu0 %1595
    %1597 = vrot.lane.b32.xlu0 %v1586, 126
    %v1598 = vpop.permute.xlu0 %1597
    %v1603 = vadd.f32 %v1563, %v1592
    %v1604 = vadd.f32 %v1564, %v1594
    %v1605 = vadd.f32 %v1565, %v1596
    %v1606 = vadd.f32 %v1566, %v1598
    %1607 = vst.msk [vmem:[#allocation2] sm:$0xff] %vm361, %v1603
    %1608 = vst.msk [vmem:[#allocation2 + $0x8] sm:$0xff] %vm361, %v1604
    %1609 = vst.msk [vmem:[#allocation2 + $0x10] sm:$0xff] %vm361, %v1605
    %1610 = vst.msk [vmem:[#allocation2 + $0x18] sm:$0xf] %vm365, %v1606
    %v1611 = vld [vmem:[#allocation2] sm:$0xff]
    %v1612 = vld [vmem:[#allocation2 + $0x8] sm:$0xff]
    %v1613 = vmul.f32 %v1611, %v1302
    %v1614 = vmul.f32 %v1612, %v1302
    %v1615 = vld [vmem:[#allocation2 + $0x1] sm:$0xff]
    %v1616 = vld [vmem:[#allocation2 + $0x9] sm:$0xff]
    %v1617 = vmul.f32 %v1615, %v1307
    %v1618 = vmul.f32 %v1616, %v1307
    %v1619 = vld [vmem:[#allocation2 + $0x2] sm:$0xff]
    %v1620 = vld [vmem:[#allocation2 + $0xa] sm:$0xff]
    %v1621 = vmul.f32 %v1619, %v1312
    %v1622 = vmul.f32 %v1620, %v1312
    %v1623 = vld [vmem:[#allocation2 + $0x3] sm:$0xff]
    %v1624 = vld [vmem:[#allocation2 + $0xb] sm:$0xff]
    %v1625 = vmul.f32 %v1623, %v1317
    %v1626 = vmul.f32 %v1624, %v1317
    %v1627 = vld [vmem:[#allocation2 + $0x4] sm:$0xff]
    %v1628 = vld [vmem:[#allocation2 + $0xc] sm:$0xff]
    %v1629 = vmul.f32 %v1627, %v1322
    %v1630 = vmul.f32 %v1628, %v1322
    %v1631 = vadd.f32 %v1613, %v1629
    %v1632 = vadd.f32 %v1614, %v1630
    %v1633 = vld [vmem:[#allocation2 + $0x5] sm:$0xff]
    %v1634 = vld [vmem:[#allocation2 + $0xd] sm:$0xff]
    %v1635 = vmul.f32 %v1633, %v1347
    %v1636 = vmul.f32 %v1634, %v1347
    %v1637 = vadd.f32 %v1617, %v1635
    %v1638 = vadd.f32 %v1618, %v1636
    %v1639 = vld [vmem:[#allocation2 + $0x6] sm:$0xff]
    %v1640 = vld [vmem:[#allocation2 + $0xe] sm:$0xff]
    %v1641 = vmul.f32 %v1639, %v1372
    %v1642 = vmul.f32 %v1640, %v1372
    %v1643 = vadd.f32 %v1621, %v1641
    %v1644 = vadd.f32 %v1622, %v1642
    %v1645 = vld [vmem:[#allocation2 + $0x7] sm:$0xff]
    %v1646 = vld [vmem:[#allocation2 + $0xf] sm:$0xff]
    %v1647 = vmul.f32 %v1645, %v1397
    %v1648 = vmul.f32 %v1646, %v1397
    %v1649 = vadd.f32 %v1625, %v1647
    %v1650 = vadd.f32 %v1626, %v1648
    %v1651 = vld [vmem:[#allocation2 + $0x10] sm:$0xff]
    %v1652 = vmul.f32 %v1612, %v1422
    %v1653 = vmul.f32 %v1651, %v1422
    %v1654 = vadd.f32 %v1631, %v1652
    %v1655 = vadd.f32 %v1632, %v1653
    %v1656 = vld [vmem:[#allocation2 + $0x11] sm:$0xff]
    %v1657 = vmul.f32 %v1616, %v1447
    %v1658 = vmul.f32 %v1656, %v1447
    %v1659 = vadd.f32 %v1637, %v1657
    %v1660 = vadd.f32 %v1638, %v1658
    %v1661 = vld [vmem:[#allocation2 + $0x12] sm:$0xff]
    %v1662 = vmul.f32 %v1620, %v1472
    %v1663 = vmul.f32 %v1661, %v1472
    %v1664 = vadd.f32 %v1643, %v1662
    %v1665 = vadd.f32 %v1644, %v1663
    %v1666 = vld [vmem:[#allocation2 + $0x13] sm:$0xff]
    %v1667 = vmul.f32 %v1624, %v1497
    %v1668 = vmul.f32 %v1666, %v1497
    %v1669 = vadd.f32 %v1649, %v1667
    %v1670 = vadd.f32 %v1650, %v1668
    %v1671 = vld [vmem:[#allocation2 + $0x14] sm:$0xff]
    %v1672 = vmul.f32 %v1628, %v1522
    %v1673 = vmul.f32 %v1671, %v1522
    %v1674 = vadd.f32 %v1654, %v1672
    %v1675 = vadd.f32 %v1655, %v1673
    %v1676 = vadd.f32 %v1674, %v1659
    %v1677 = vadd.f32 %v1675, %v1660
    %v1678 = vadd.f32 %v1664, %v1669
    %v1679 = vadd.f32 %v1665, %v1670
    %v1680 = vadd.f32 %v1676, %v1678
    %v1681 = vadd.f32 %v1677, %v1679
    %s1682 = scalar_lea.vmem [#allocation6], 48
    %1683 = vst.msk [vmem:[%s1682] sm:$0xff] %vm361, %v1680
    %1684 = vst.msk [vmem:[%s1682 + $0x8] sm:$0xff] %vm361, %v1681
    // Predicated region
    $region14: #{heatmap_filter_gaussian.1} parent=1 // pred_check
      _
    $region15: #{heatmap_filter_gaussian.1} parent=1 // pred_check_branch
      %1686 = sbr.rel (0) target = $region17
    $region16: #{heatmap_filter_gaussian.1} parent=1 // pred_region
      %s1688 = ssub.s32 1024, 1024
      %1689 = vsyncadd [#allocation4], %s1688
      %s1690 = sshll.u32 [#allocation6], 4
      %s1691 = int_to_ptr.vmem [resolvable:$true] %s1690
      %1696 = dma.vmem_to_hbm [thread:$0]  %s1691, 1024, %s2, [#allocation4], 128, 128, 8
    $region17: #{heatmap_filter_gaussian.1} parent=1 // pred_fallthru
      _
    // Predicated region
    $region18: #{heatmap_filter_gaussian.1} parent=1 // pred_check
      _
    $region19: #{heatmap_filter_gaussian.1} parent=1 // pred_check_branch
      %1698 = sbr.rel (0) target = $region21
    $region20: #{heatmap_filter_gaussian.1} parent=1 // pred_region
      %1699 = dma.done [#allocation4], 1024
    $region21: #{heatmap_filter_gaussian.1} parent=1 // pred_fallthru
      _
    %1700 = vsyncpa [#allocation4], 1
    %1701 = vsyncpa [#allocation5], 1

</llo_original>
